<compile_context>
chip_gen: v7x
topology: tpu7x:2x2x1
jax: 0.10.0
libtpu: 0.0.40
codegen_flags: <defaults>
</compile_context>

<pallas_src>
import functools
import math

import jax
import jax.numpy as jnp
import numpy as np
from jax.experimental import pallas as pl
from jax.experimental.pallas import tpu as pltpu


def transblock_kernel(x_ref, mask_ref, emb_ref,
                      wqkv_ref, wl_ref, ww_ref, wo_ref,
                      chw_ref, chb_ref, w1_ref, w2_ref,
                      g1_ref, b1_ref, g2_ref, b2_ref,
                      o_ref, *, B, S, H, DK, DV, HV, eps):
    x2 = x_ref[...]                                   # (N, C) f32, N = B*S
    N, C = x2.shape
    HDK = H * DK
    HDV = H * DV
    U = w1_ref.shape[1]

    # ---------------- fused Q/K/V projection (one lane-dense matmul) --------
    qkv = jnp.dot(x2, wqkv_ref[...], preferred_element_type=jnp.float32)
    q = qkv[:, :HDK].reshape(B, S, HDK)               # heads concatenated
    k = qkv[:, HDK:2 * HDK].reshape(B, S, HDK)
    v = qkv[:, 2 * HDK:].reshape(B, S, HDV)

    # wl_ref already contains sig_q*sig_k*Wl[d,e] repeated per DK column block
    wl = wl_ref[...].reshape(H, 1, 1, HDK)            # (H,1,1,HDK) constant
    mask_b = jnp.broadcast_to(mask_ref[...][:, None, :], (B, S, S))  # hoisted

    # ------- talking-heads-before-softmax folded into QK^T + softmax --------
    wsm = []
    for e in range(H):
        el = jnp.einsum('bqd,bkd->bqk', q * wl[e], k,
                        preferred_element_type=jnp.float32) - mask_b  # (B,S,S)
        m = jnp.max(el, axis=-1, keepdims=True)
        p = jnp.exp(el - m)
        wsm.append(p * pl.reciprocal(jnp.sum(p, axis=-1, keepdims=True),
                                     approx=True))

    # ------- talking-heads-after-softmax + attend values + fused Wo ---------
    o_parts = []
    for e in range(HV):
        u = ww_ref[e] * wsm[0]                        # ww already has sig_v
        for d in range(1, H):
            u = u + ww_ref[d * HV + e] * wsm[d]
        o_parts.append(jnp.einsum('bqk,bkd->bqd', u, v[:, :, e * DV:(e + 1) * DV],
                                  preferred_element_type=jnp.float32))
    o_cat = jnp.concatenate(o_parts, axis=-1).reshape(N, HV * DV)   # e-major
    resid = jnp.dot(o_cat, wo_ref[...], preferred_element_type=jnp.float32)
    out1 = x2 + resid                                 # shortcut == Identity

    # -------- BatchNorm1d #1 (training mode: per-channel batch stats) -------
    mu1 = jnp.mean(out1, axis=0, keepdims=True)
    var1 = jnp.mean((out1 - mu1) ** 2, axis=0, keepdims=True)
    yn = (out1 - mu1) * jax.lax.rsqrt(var1 + eps) * g1_ref[...] + b1_ref[...]

    # ---------------- FFN ----------------
    emb = jnp.dot(emb_ref[...], chw_ref[...],
                  preferred_element_type=jnp.float32) + chb_ref[...]  # (B, U)
    emb_rows = jnp.broadcast_to(emb[:, None, :], (B, S, U)).reshape(N, U)
    h1 = jnp.maximum(jnp.dot(yn, w1_ref[...],
                             preferred_element_type=jnp.float32) + emb_rows, 0.0)
    h2 = jnp.dot(h1, w2_ref[...], preferred_element_type=jnp.float32)
    out2 = yn + h2

    # -------- BatchNorm1d #2 --------
    mu2 = jnp.mean(out2, axis=0, keepdims=True)
    var2 = jnp.mean((out2 - mu2) ** 2, axis=0, keepdims=True)
    o_ref[...] = (out2 - mu2) * jax.lax.rsqrt(var2 + eps) * g2_ref[...] + b2_ref[...]


def transblock_forward(inp, embinp, mask, params):
    """inp: (B, C, S), embinp: (B, E), mask: (B, S)  ->  (B, C, S)"""
    B, C, S = inp.shape
    Wq, Wk, Wv, Wo = params['Wq'], params['Wk'], params['Wv'], params['Wo']
    DK = Wq.shape[1]
    DV = Wv.shape[1]
    H = Wq.shape[2]
    HV = params['Ww'].shape[1]

    # channels-last, row-flattened activations
    x2 = jnp.transpose(inp, (0, 2, 1)).reshape(B * S, C).astype(jnp.float32)

    # ---------------- wrapper-side constant folding (weights only) ----------
    sig_q = 1.0 / (1.0 + math.exp(-float(params['alphaq'])))
    sig_k = 1.0 / (1.0 + math.exp(-float(params['alphak'])))
    sig_v = 1.0 / (1.0 + math.exp(-float(params['alphav'])))

    # fused QKV weight, heads concatenated along the output (lane) axis
    wq_cat = jnp.transpose(Wq, (0, 2, 1)).reshape(C, H * DK)
    wk_cat = jnp.transpose(Wk, (0, 2, 1)).reshape(C, H * DK)
    wv_cat = jnp.transpose(Wv, (0, 2, 1)).reshape(C, H * DV)
    wqkv = jnp.concatenate([wq_cat, wk_cat, wv_cat], axis=1)   # (C, 2HDK+HDV)

    # pre-softmax head-talking folded: wl_scale[e, d*DK+j] = sig_q*sig_k*Wl[d,e]
    wl_scale = (sig_q * sig_k) * jnp.repeat(params['Wl'].T, DK, axis=1)  # (H, H*DK)
    # sigmoid(alphav) folded into the tiny post-softmax head-talking matrix
    ww_flat = (sig_v * params['Ww']).reshape(-1)                         # (H*HV,)
    # torch flattens O as (dv, hv) row-major; regroup Wo rows e-major (hv, dv)
    wo_cat = jnp.transpose(Wo.reshape(DV, HV, C), (1, 0, 2)).reshape(HV * DV, C)

    kernel_fn = functools.partial(transblock_kernel,
                                  B=B, S=S, H=H, DK=DK, DV=DV, HV=HV, eps=1e-5)

    vspec = pl.BlockSpec(memory_space=pltpu.MemorySpace.VMEM)
    sspec = pl.BlockSpec(memory_space=pltpu.MemorySpace.SMEM)

    out2d = pl.pallas_call(
        kernel_fn,
        out_shape=jax.ShapeDtypeStruct((B * S, C), jnp.float32),
        in_specs=[vspec, vspec, vspec,          # x2, mask, embinp
                  vspec,                        # fused Wqkv
                  vspec,                        # wl_scale (H, H*DK)
                  sspec,                        # ww (tiny, scalar reads)
                  vspec,                        # wo_cat
                  vspec, vspec,                 # chce W, chce b
                  vspec, vspec,                 # W1, W2
                  vspec, vspec, vspec, vspec],  # gamma1, beta1, gamma2, beta2
        out_specs=vspec,
    )(x2, mask.astype(jnp.float32), embinp.astype(jnp.float32),
      wqkv, wl_scale, ww_flat, wo_cat,
      params['chce_W'], params['chce_b'].reshape(1, -1),
      params['W1'], params['W2'],
      params['g1'].reshape(1, -1), params['b1'].reshape(1, -1),
      params['g2'].reshape(1, -1), params['b2'].reshape(1, -1))

    return jnp.transpose(out2d.reshape(B, S, C), (0, 2, 1))     # back to (B, C, S)


# ---------------- pure-JAX reference (torch layout / torch einsum strings) ----------------
def _bn_ref(x, g, b, eps):
    mu = x.mean(axis=(0, 2), keepdims=True)
    var = ((x - mu) ** 2).mean(axis=(0, 2), keepdims=True)
    return (x - mu) / jnp.sqrt(var + eps) * g[None, :, None] + b[None, :, None]


def transblock_ref(inp, embinp, mask, p, sig_q, sig_k, sig_v, eps=1e-5):
    with jax.default_matmul_precision('float32'):
        Q = sig_q * jnp.einsum('abc,bde->adce', inp, p['Wq'])
        K = sig_k * jnp.einsum('abc,bde->adce', inp, p['Wk'])
        V = sig_v * jnp.einsum('abc,bde->adce', inp, p['Wv'])
        J = jnp.einsum('abcd,abed->aced', Q, K)
        EL = jnp.einsum('abcd,de->abce', J, p['Wl']) - mask[:, None, :, None]
        W = jax.nn.softmax(EL, axis=2)
        U = jnp.einsum('abcd,de->abce', W, p['Ww'])
        O = jnp.einsum('abcd,aecd->abed', U, V)
        O = O.reshape(O.shape[0], O.shape[1], -1)
        resid = jnp.einsum('abc,cd->adb', O, p['Wo'])
        out = inp + resid
        out = _bn_ref(out, p['g1'], p['b1'], eps)
        emb = (embinp @ p['chce_W'] + p['chce_b'])[:, :, None]
        r1 = jnp.maximum(jnp.einsum('abc,bd->adc', out, p['W1']) + emb, 0.0)
        r2 = jnp.einsum('abc,bd->adc', r1, p['W2'])
        out = out + r2
        out = _bn_ref(out, p['g2'], p['b2'], eps)
    return out


if __name__ == "__main__":
    # hargs = (in_ch=32, dk=16, dv=16, hv=4, hk=None, h=None, drop=0, out_dim=None)
    # fargs = (in_ch=32, units=32, embed=8, learn_embed=True, drop=0)
    B, C, S = 2, 32, 16
    DK, DV, H = 16, 16, 4
    E, U = 8, 32

    key = jax.random.PRNGKey(0)
    ks = jax.random.split(key, 12)

    params = {
        'Wq': jax.random.normal(ks[0], (C, DK, H), jnp.float32) * (C ** -0.5) * (DK ** -0.25),
        'Wk': jax.random.normal(ks[1], (C, DK, H), jnp.float32) * (C ** -0.5) * (DK ** -0.25),
        'Wv': jax.random.normal(ks[2], (C, DV, H), jnp.float32)
              * ((1.0 / 0.012) * (H ** -0.5) * (C ** -0.5) * (40.0 ** -0.5)),
        'Wl': jax.random.normal(ks[3], (H, H), jnp.float32) * (0.5 * H ** -0.5),
        'Ww': jax.random.normal(ks[4], (H, H), jnp.float32) * 0.01,
        'Wo': jax.random.normal(ks[5], (DV * H, C), jnp.float32) * 0.03,
        'alphaq': jnp.float32(2.0), 'alphak': jnp.float32(2.0), 'alphav': jnp.float32(2.0),
        'W1': jax.random.normal(ks[6], (C, U), jnp.float32) * (C ** -0.5),
        'W2': jax.random.normal(ks[7], (U, C), jnp.float32) * (0.1 * U ** -0.5),
        'chce_W': jax.random.normal(ks[8], (E, U), jnp.float32) * (E ** -0.5),
        'chce_b': jax.random.normal(ks[9], (U,), jnp.float32) * 0.01,
        'g1': jnp.ones((C,), jnp.float32), 'b1': jnp.zeros((C,), jnp.float32),
        'g2': jnp.ones((C,), jnp.float32), 'b2': jnp.zeros((C,), jnp.float32),
    }

    inp = jax.random.normal(ks[10], (B, C, S), jnp.float32)
    embinp = jax.random.normal(ks[11], (B, E), jnp.float32)
    mask = jnp.zeros((B, S), jnp.float32).at[1, 12:].set(1e9)   # mask tail of 2nd sequence

    out = transblock_forward(inp, embinp, mask, params)
    out = jax.block_until_ready(out)

    sig = 1.0 / (1.0 + math.exp(-2.0))
    ref = transblock_ref(inp, embinp, mask, params, sig, sig, sig)
    np.testing.assert_allclose(np.asarray(out), np.asarray(ref), rtol=2e-2, atol=2e-2)
    print("KERNEL_OK")
</pallas_src>

<mosaic_0001>
module attributes {stable_mosaic.version = 11 : i64} {
  func.func @transblock_kernel(%arg0: memref<32x32xf32, #tpu.memory_space<vmem>>, %arg1: memref<2x16xf32, #tpu.memory_space<vmem>>, %arg2: memref<2x8xf32, #tpu.memory_space<vmem>>, %arg3: memref<32x192xf32, #tpu.memory_space<vmem>>, %arg4: memref<4x64xf32, #tpu.memory_space<vmem>>, %arg5: memref<16xf32, #tpu.memory_space<smem>>, %arg6: memref<64x32xf32, #tpu.memory_space<vmem>>, %arg7: memref<8x32xf32, #tpu.memory_space<vmem>>, %arg8: memref<1x32xf32, #tpu.memory_space<vmem>>, %arg9: memref<32x32xf32, #tpu.memory_space<vmem>>, %arg10: memref<32x32xf32, #tpu.memory_space<vmem>>, %arg11: memref<1x32xf32, #tpu.memory_space<vmem>>, %arg12: memref<1x32xf32, #tpu.memory_space<vmem>>, %arg13: memref<1x32xf32, #tpu.memory_space<vmem>>, %arg14: memref<1x32xf32, #tpu.memory_space<vmem>>, %arg15: memref<32x32xf32, #tpu.memory_space<vmem>>) attributes {dimension_semantics = [], scalar_prefetch = 0 : i64, scratch_operands = 0 : i64, tpu.core_type = #tpu.core_type<tc>} {
    %c0 = arith.constant 0 : index
    %c0_0 = arith.constant 0 : index
    %0 = vector.load %arg0[%c0, %c0_0] : memref<32x32xf32, #tpu.memory_space<vmem>>, vector<32x32xf32>
    %c0_1 = arith.constant 0 : index
    %c0_2 = arith.constant 0 : index
    %1 = vector.load %arg3[%c0_1, %c0_2] : memref<32x192xf32, #tpu.memory_space<vmem>>, vector<32x192xf32>
    %cst = arith.constant dense<0.000000e+00> : vector<32x192xf32>
    %2 = tpu.matmul %0, %1, %cst {dimension_numbers = #tpu.dot_dimension_numbers<[1], [0], [0], [1], [0, 0, 1, 1], [], []>} : vector<32x32xf32>, vector<32x192xf32>, vector<32x192xf32> -> vector<32x192xf32>
    %3 = vector.extract_strided_slice %2 {offsets = [0, 0], sizes = [32, 64], strides = [1, 1]} : vector<32x192xf32> to vector<32x64xf32>
    %4 = vector.shape_cast %3 : vector<32x64xf32> to vector<2x16x64xf32>
    %5 = vector.extract_strided_slice %2 {offsets = [0, 64], sizes = [32, 64], strides = [1, 1]} : vector<32x192xf32> to vector<32x64xf32>
    %6 = vector.shape_cast %5 : vector<32x64xf32> to vector<2x16x64xf32>
    %7 = vector.extract_strided_slice %2 {offsets = [0, 128], sizes = [32, 64], strides = [1, 1]} : vector<32x192xf32> to vector<32x64xf32>
    %8 = vector.shape_cast %7 : vector<32x64xf32> to vector<2x16x64xf32>
    %c0_3 = arith.constant 0 : index
    %c0_4 = arith.constant 0 : index
    %9 = vector.load %arg4[%c0_3, %c0_4] : memref<4x64xf32, #tpu.memory_space<vmem>>, vector<4x64xf32>
    %10 = vector.shape_cast %9 : vector<4x64xf32> to vector<4x1x1x64xf32>
    %c0_5 = arith.constant 0 : index
    %c0_6 = arith.constant 0 : index
    %11 = vector.load %arg1[%c0_5, %c0_6] : memref<2x16xf32, #tpu.memory_space<vmem>>, vector<2x16xf32>
    %12 = vector.shape_cast %11 : vector<2x16xf32> to vector<2x1x16xf32>
    %13 = vector.shape_cast %12 : vector<2x1x16xf32> to vector<2x1x16xf32>
    %14 = vector.broadcast %13 : vector<2x1x16xf32> to vector<2x16x16xf32>
    %15 = vector.extract_strided_slice %10 {offsets = [0, 0, 0, 0], sizes = [1, 1, 1, 64], strides = [1, 1, 1, 1]} : vector<4x1x1x64xf32> to vector<1x1x1x64xf32>
    %16 = vector.shape_cast %15 : vector<1x1x1x64xf32> to vector<1x1x64xf32>
    %17 = vector.broadcast %16 : vector<1x1x64xf32> to vector<2x16x64xf32>
    %18 = arith.mulf %4, %17 : vector<2x16x64xf32>
    "tpu.trace_start"() <{level = 10 : i32, message = "bqd,bkd->bqk"}> : () -> ()
    %cst_7 = arith.constant dense<0.000000e+00> : vector<2x16x16xf32>
    %19 = tpu.matmul %18, %6, %cst_7 {dimension_numbers = #tpu.dot_dimension_numbers<[2], [2], [1], [1], [0, 0, 0, 1, 1, 1], [0], [0]>} : vector<2x16x64xf32>, vector<2x16x64xf32>, vector<2x16x16xf32> -> vector<2x16x16xf32>
    "tpu.trace_stop"() : () -> ()
    %20 = arith.subf %19, %14 : vector<2x16x16xf32>
    %cst_8 = arith.constant dense<0xFF800000> : vector<2x16xf32>
    %21 = vector.multi_reduction <maximumf>, %20, %cst_8 [2] : vector<2x16x16xf32> to vector<2x16xf32>
    %22 = vector.shape_cast %21 : vector<2x16xf32> to vector<2x16x1xf32>
    %23 = vector.broadcast %22 : vector<2x16x1xf32> to vector<2x16x16xf32>
    %24 = arith.subf %20, %23 : vector<2x16x16xf32>
    %25 = math.exp %24 : vector<2x16x16xf32>
    %cst_9 = arith.constant dense<0.000000e+00> : vector<2x16xf32>
    %26 = vector.multi_reduction <add>, %25, %cst_9 [2] : vector<2x16x16xf32> to vector<2x16xf32>
    %27 = vector.shape_cast %26 : vector<2x16xf32> to vector<2x16x1xf32>
    %28 = tpu.reciprocal %27 {approx = true} : vector<2x16x1xf32> -> vector<2x16x1xf32>
    %29 = vector.broadcast %28 : vector<2x16x1xf32> to vector<2x16x16xf32>
    %30 = arith.mulf %25, %29 : vector<2x16x16xf32>
    %31 = vector.extract_strided_slice %10 {offsets = [1, 0, 0, 0], sizes = [1, 1, 1, 64], strides = [1, 1, 1, 1]} : vector<4x1x1x64xf32> to vector<1x1x1x64xf32>
    %32 = vector.shape_cast %31 : vector<1x1x1x64xf32> to vector<1x1x64xf32>
    %33 = vector.broadcast %32 : vector<1x1x64xf32> to vector<2x16x64xf32>
    %34 = arith.mulf %4, %33 : vector<2x16x64xf32>
    "tpu.trace_start"() <{level = 10 : i32, message = "bqd,bkd->bqk"}> : () -> ()
    %cst_10 = arith.constant dense<0.000000e+00> : vector<2x16x16xf32>
    %35 = tpu.matmul %34, %6, %cst_10 {dimension_numbers = #tpu.dot_dimension_numbers<[2], [2], [1], [1], [0, 0, 0, 1, 1, 1], [0], [0]>} : vector<2x16x64xf32>, vector<2x16x64xf32>, vector<2x16x16xf32> -> vector<2x16x16xf32>
    "tpu.trace_stop"() : () -> ()
    %36 = arith.subf %35, %14 : vector<2x16x16xf32>
    %cst_11 = arith.constant dense<0xFF800000> : vector<2x16xf32>
    %37 = vector.multi_reduction <maximumf>, %36, %cst_11 [2] : vector<2x16x16xf32> to vector<2x16xf32>
    %38 = vector.shape_cast %37 : vector<2x16xf32> to vector<2x16x1xf32>
    %39 = vector.broadcast %38 : vector<2x16x1xf32> to vector<2x16x16xf32>
    %40 = arith.subf %36, %39 : vector<2x16x16xf32>
    %41 = math.exp %40 : vector<2x16x16xf32>
    %cst_12 = arith.constant dense<0.000000e+00> : vector<2x16xf32>
    %42 = vector.multi_reduction <add>, %41, %cst_12 [2] : vector<2x16x16xf32> to vector<2x16xf32>
    %43 = vector.shape_cast %42 : vector<2x16xf32> to vector<2x16x1xf32>
    %44 = tpu.reciprocal %43 {approx = true} : vector<2x16x1xf32> -> vector<2x16x1xf32>
    %45 = vector.broadcast %44 : vector<2x16x1xf32> to vector<2x16x16xf32>
    %46 = arith.mulf %41, %45 : vector<2x16x16xf32>
    %47 = vector.extract_strided_slice %10 {offsets = [2, 0, 0, 0], sizes = [1, 1, 1, 64], strides = [1, 1, 1, 1]} : vector<4x1x1x64xf32> to vector<1x1x1x64xf32>
    %48 = vector.shape_cast %47 : vector<1x1x1x64xf32> to vector<1x1x64xf32>
    %49 = vector.broadcast %48 : vector<1x1x64xf32> to vector<2x16x64xf32>
    %50 = arith.mulf %4, %49 : vector<2x16x64xf32>
    "tpu.trace_start"() <{level = 10 : i32, message = "bqd,bkd->bqk"}> : () -> ()
    %cst_13 = arith.constant dense<0.000000e+00> : vector<2x16x16xf32>
    %51 = tpu.matmul %50, %6, %cst_13 {dimension_numbers = #tpu.dot_dimension_numbers<[2], [2], [1], [1], [0, 0, 0, 1, 1, 1], [0], [0]>} : vector<2x16x64xf32>, vector<2x16x64xf32>, vector<2x16x16xf32> -> vector<2x16x16xf32>
    "tpu.trace_stop"() : () -> ()
    %52 = arith.subf %51, %14 : vector<2x16x16xf32>
    %cst_14 = arith.constant dense<0xFF800000> : vector<2x16xf32>
    %53 = vector.multi_reduction <maximumf>, %52, %cst_14 [2] : vector<2x16x16xf32> to vector<2x16xf32>
    %54 = vector.shape_cast %53 : vector<2x16xf32> to vector<2x16x1xf32>
    %55 = vector.broadcast %54 : vector<2x16x1xf32> to vector<2x16x16xf32>
    %56 = arith.subf %52, %55 : vector<2x16x16xf32>
    %57 = math.exp %56 : vector<2x16x16xf32>
    %cst_15 = arith.constant dense<0.000000e+00> : vector<2x16xf32>
    %58 = vector.multi_reduction <add>, %57, %cst_15 [2] : vector<2x16x16xf32> to vector<2x16xf32>
    %59 = vector.shape_cast %58 : vector<2x16xf32> to vector<2x16x1xf32>
    %60 = tpu.reciprocal %59 {approx = true} : vector<2x16x1xf32> -> vector<2x16x1xf32>
    %61 = vector.broadcast %60 : vector<2x16x1xf32> to vector<2x16x16xf32>
    %62 = arith.mulf %57, %61 : vector<2x16x16xf32>
    %63 = vector.extract_strided_slice %10 {offsets = [3, 0, 0, 0], sizes = [1, 1, 1, 64], strides = [1, 1, 1, 1]} : vector<4x1x1x64xf32> to vector<1x1x1x64xf32>
    %64 = vector.shape_cast %63 : vector<1x1x1x64xf32> to vector<1x1x64xf32>
    %65 = vector.broadcast %64 : vector<1x1x64xf32> to vector<2x16x64xf32>
    %66 = arith.mulf %4, %65 : vector<2x16x64xf32>
    "tpu.trace_start"() <{level = 10 : i32, message = "bqd,bkd->bqk"}> : () -> ()
    %cst_16 = arith.constant dense<0.000000e+00> : vector<2x16x16xf32>
    %67 = tpu.matmul %66, %6, %cst_16 {dimension_numbers = #tpu.dot_dimension_numbers<[2], [2], [1], [1], [0, 0, 0, 1, 1, 1], [0], [0]>} : vector<2x16x64xf32>, vector<2x16x64xf32>, vector<2x16x16xf32> -> vector<2x16x16xf32>
    "tpu.trace_stop"() : () -> ()
    %68 = arith.subf %67, %14 : vector<2x16x16xf32>
    %cst_17 = arith.constant dense<0xFF800000> : vector<2x16xf32>
    %69 = vector.multi_reduction <maximumf>, %68, %cst_17 [2] : vector<2x16x16xf32> to vector<2x16xf32>
    %70 = vector.shape_cast %69 : vector<2x16xf32> to vector<2x16x1xf32>
    %71 = vector.broadcast %70 : vector<2x16x1xf32> to vector<2x16x16xf32>
    %72 = arith.subf %68, %71 : vector<2x16x16xf32>
    %73 = math.exp %72 : vector<2x16x16xf32>
    %cst_18 = arith.constant dense<0.000000e+00> : vector<2x16xf32>
    %74 = vector.multi_reduction <add>, %73, %cst_18 [2] : vector<2x16x16xf32> to vector<2x16xf32>
    %75 = vector.shape_cast %74 : vector<2x16xf32> to vector<2x16x1xf32>
    %76 = tpu.reciprocal %75 {approx = true} : vector<2x16x1xf32> -> vector<2x16x1xf32>
    %77 = vector.broadcast %76 : vector<2x16x1xf32> to vector<2x16x16xf32>
    %78 = arith.mulf %73, %77 : vector<2x16x16xf32>
    %c0_19 = arith.constant 0 : index
    %79 = memref.load %arg5[%c0_19] : memref<16xf32, #tpu.memory_space<smem>>
    %80 = vector.broadcast %79 : f32 to vector<2x16x16xf32>
    %81 = arith.mulf %80, %30 : vector<2x16x16xf32>
    %c4 = arith.constant 4 : index
    %82 = memref.load %arg5[%c4] : memref<16xf32, #tpu.memory_space<smem>>
    %83 = vector.broadcast %82 : f32 to vector<2x16x16xf32>
    %84 = arith.mulf %83, %46 : vector<2x16x16xf32>
    %85 = arith.addf %81, %84 : vector<2x16x16xf32>
    %c8 = arith.constant 8 : index
    %86 = memref.load %arg5[%c8] : memref<16xf32, #tpu.memory_space<smem>>
    %87 = vector.broadcast %86 : f32 to vector<2x16x16xf32>
    %88 = arith.mulf %87, %62 : vector<2x16x16xf32>
    %89 = arith.addf %85, %88 : vector<2x16x16xf32>
    %c12 = arith.constant 12 : index
    %90 = memref.load %arg5[%c12] : memref<16xf32, #tpu.memory_space<smem>>
    %91 = vector.broadcast %90 : f32 to vector<2x16x16xf32>
    %92 = arith.mulf %91, %78 : vector<2x16x16xf32>
    %93 = arith.addf %89, %92 : vector<2x16x16xf32>
    %94 = vector.extract_strided_slice %8 {offsets = [0, 0, 0], sizes = [2, 16, 16], strides = [1, 1, 1]} : vector<2x16x64xf32> to vector<2x16x16xf32>
    "tpu.trace_start"() <{level = 10 : i32, message = "bqk,bkd->bqd"}> : () -> ()
    %cst_20 = arith.constant dense<0.000000e+00> : vector<2x16x16xf32>
    %95 = tpu.matmul %93, %94, %cst_20 {dimension_numbers = #tpu.dot_dimension_numbers<[2], [1], [1], [2], [0, 0, 0, 1, 1, 2], [0], [0]>} : vector<2x16x16xf32>, vector<2x16x16xf32>, vector<2x16x16xf32> -> vector<2x16x16xf32>
    "tpu.trace_stop"() : () -> ()
    %c1 = arith.constant 1 : index
    %96 = memref.load %arg5[%c1] : memref<16xf32, #tpu.memory_space<smem>>
    %97 = vector.broadcast %96 : f32 to vector<2x16x16xf32>
    %98 = arith.mulf %97, %30 : vector<2x16x16xf32>
    %c5 = arith.constant 5 : index
    %99 = memref.load %arg5[%c5] : memref<16xf32, #tpu.memory_space<smem>>
    %100 = vector.broadcast %99 : f32 to vector<2x16x16xf32>
    %101 = arith.mulf %100, %46 : vector<2x16x16xf32>
    %102 = arith.addf %98, %101 : vector<2x16x16xf32>
    %c9 = arith.constant 9 : index
    %103 = memref.load %arg5[%c9] : memref<16xf32, #tpu.memory_space<smem>>
    %104 = vector.broadcast %103 : f32 to vector<2x16x16xf32>
    %105 = arith.mulf %104, %62 : vector<2x16x16xf32>
    %106 = arith.addf %102, %105 : vector<2x16x16xf32>
    %c13 = arith.constant 13 : index
    %107 = memref.load %arg5[%c13] : memref<16xf32, #tpu.memory_space<smem>>
    %108 = vector.broadcast %107 : f32 to vector<2x16x16xf32>
    %109 = arith.mulf %108, %78 : vector<2x16x16xf32>
    %110 = arith.addf %106, %109 : vector<2x16x16xf32>
    %111 = vector.extract_strided_slice %8 {offsets = [0, 0, 16], sizes = [2, 16, 16], strides = [1, 1, 1]} : vector<2x16x64xf32> to vector<2x16x16xf32>
    "tpu.trace_start"() <{level = 10 : i32, message = "bqk,bkd->bqd"}> : () -> ()
    %cst_21 = arith.constant dense<0.000000e+00> : vector<2x16x16xf32>
    %112 = tpu.matmul %110, %111, %cst_21 {dimension_numbers = #tpu.dot_dimension_numbers<[2], [1], [1], [2], [0, 0, 0, 1, 1, 2], [0], [0]>} : vector<2x16x16xf32>, vector<2x16x16xf32>, vector<2x16x16xf32> -> vector<2x16x16xf32>
    "tpu.trace_stop"() : () -> ()
    %c2 = arith.constant 2 : index
    %113 = memref.load %arg5[%c2] : memref<16xf32, #tpu.memory_space<smem>>
    %114 = vector.broadcast %113 : f32 to vector<2x16x16xf32>
    %115 = arith.mulf %114, %30 : vector<2x16x16xf32>
    %c6 = arith.constant 6 : index
    %116 = memref.load %arg5[%c6] : memref<16xf32, #tpu.memory_space<smem>>
    %117 = vector.broadcast %116 : f32 to vector<2x16x16xf32>
    %118 = arith.mulf %117, %46 : vector<2x16x16xf32>
    %119 = arith.addf %115, %118 : vector<2x16x16xf32>
    %c10 = arith.constant 10 : index
    %120 = memref.load %arg5[%c10] : memref<16xf32, #tpu.memory_space<smem>>
    %121 = vector.broadcast %120 : f32 to vector<2x16x16xf32>
    %122 = arith.mulf %121, %62 : vector<2x16x16xf32>
    %123 = arith.addf %119, %122 : vector<2x16x16xf32>
    %c14 = arith.constant 14 : index
    %124 = memref.load %arg5[%c14] : memref<16xf32, #tpu.memory_space<smem>>
    %125 = vector.broadcast %124 : f32 to vector<2x16x16xf32>
    %126 = arith.mulf %125, %78 : vector<2x16x16xf32>
    %127 = arith.addf %123, %126 : vector<2x16x16xf32>
    %128 = vector.extract_strided_slice %8 {offsets = [0, 0, 32], sizes = [2, 16, 16], strides = [1, 1, 1]} : vector<2x16x64xf32> to vector<2x16x16xf32>
    "tpu.trace_start"() <{level = 10 : i32, message = "bqk,bkd->bqd"}> : () -> ()
    %cst_22 = arith.constant dense<0.000000e+00> : vector<2x16x16xf32>
    %129 = tpu.matmul %127, %128, %cst_22 {dimension_numbers = #tpu.dot_dimension_numbers<[2], [1], [1], [2], [0, 0, 0, 1, 1, 2], [0], [0]>} : vector<2x16x16xf32>, vector<2x16x16xf32>, vector<2x16x16xf32> -> vector<2x16x16xf32>
    "tpu.trace_stop"() : () -> ()
    %c3 = arith.constant 3 : index
    %130 = memref.load %arg5[%c3] : memref<16xf32, #tpu.memory_space<smem>>
    %131 = vector.broadcast %130 : f32 to vector<2x16x16xf32>
    %132 = arith.mulf %131, %30 : vector<2x16x16xf32>
    %c7 = arith.constant 7 : index
    %133 = memref.load %arg5[%c7] : memref<16xf32, #tpu.memory_space<smem>>
    %134 = vector.broadcast %133 : f32 to vector<2x16x16xf32>
    %135 = arith.mulf %134, %46 : vector<2x16x16xf32>
    %136 = arith.addf %132, %135 : vector<2x16x16xf32>
    %c11 = arith.constant 11 : index
    %137 = memref.load %arg5[%c11] : memref<16xf32, #tpu.memory_space<smem>>
    %138 = vector.broadcast %137 : f32 to vector<2x16x16xf32>
    %139 = arith.mulf %138, %62 : vector<2x16x16xf32>
    %140 = arith.addf %136, %139 : vector<2x16x16xf32>
    %c15 = arith.constant 15 : index
    %141 = memref.load %arg5[%c15] : memref<16xf32, #tpu.memory_space<smem>>
    %142 = vector.broadcast %141 : f32 to vector<2x16x16xf32>
    %143 = arith.mulf %142, %78 : vector<2x16x16xf32>
    %144 = arith.addf %140, %143 : vector<2x16x16xf32>
    %145 = vector.extract_strided_slice %8 {offsets = [0, 0, 48], sizes = [2, 16, 16], strides = [1, 1, 1]} : vector<2x16x64xf32> to vector<2x16x16xf32>
    "tpu.trace_start"() <{level = 10 : i32, message = "bqk,bkd->bqd"}> : () -> ()
    %cst_23 = arith.constant dense<0.000000e+00> : vector<2x16x16xf32>
    %146 = tpu.matmul %144, %145, %cst_23 {dimension_numbers = #tpu.dot_dimension_numbers<[2], [1], [1], [2], [0, 0, 0, 1, 1, 2], [0], [0]>} : vector<2x16x16xf32>, vector<2x16x16xf32>, vector<2x16x16xf32> -> vector<2x16x16xf32>
    "tpu.trace_stop"() : () -> ()
    %147 = tpu.concatenate %95, %112, %129, %146 in 2 : vector<2x16x16xf32>, vector<2x16x16xf32>, vector<2x16x16xf32>, vector<2x16x16xf32> -> vector<2x16x64xf32>
    %148 = vector.shape_cast %147 : vector<2x16x64xf32> to vector<32x64xf32>
    %c0_24 = arith.constant 0 : index
    %c0_25 = arith.constant 0 : index
    %149 = vector.load %arg6[%c0_24, %c0_25] : memref<64x32xf32, #tpu.memory_space<vmem>>, vector<64x32xf32>
    %cst_26 = arith.constant dense<0.000000e+00> : vector<32x32xf32>
    %150 = tpu.matmul %148, %149, %cst_26 {dimension_numbers = #tpu.dot_dimension_numbers<[1], [0], [0], [1], [0, 0, 1, 1], [], []>} : vector<32x64xf32>, vector<64x32xf32>, vector<32x32xf32> -> vector<32x32xf32>
    %151 = arith.addf %0, %150 : vector<32x32xf32>
    %cst_27 = arith.constant dense<0.000000e+00> : vector<32xf32>
    %152 = vector.multi_reduction <add>, %151, %cst_27 [0] : vector<32x32xf32> to vector<32xf32>
    %153 = vector.shape_cast %152 : vector<32xf32> to vector<1x32xf32>
    %cst_28 = arith.constant 3.200000e+01 : f32
    %154 = vector.broadcast %cst_28 : f32 to vector<1x32xf32>
    %155 = arith.divf %153, %154 : vector<1x32xf32>
    %156 = vector.broadcast %155 : vector<1x32xf32> to vector<32x32xf32>
    %157 = arith.subf %151, %156 : vector<32x32xf32>
    %158 = arith.mulf %157, %157 : vector<32x32xf32>
    %cst_29 = arith.constant dense<0.000000e+00> : vector<32xf32>
    %159 = vector.multi_reduction <add>, %158, %cst_29 [0] : vector<32x32xf32> to vector<32xf32>
    %160 = vector.shape_cast %159 : vector<32xf32> to vector<1x32xf32>
    %cst_30 = arith.constant 3.200000e+01 : f32
    %161 = vector.broadcast %cst_30 : f32 to vector<1x32xf32>
    %162 = arith.divf %160, %161 : vector<1x32xf32>
    %163 = vector.broadcast %155 : vector<1x32xf32> to vector<32x32xf32>
    %164 = arith.subf %151, %163 : vector<32x32xf32>
    %cst_31 = arith.constant 9.99999974E-6 : f32
    %165 = vector.broadcast %cst_31 : f32 to vector<1x32xf32>
    %166 = arith.addf %162, %165 : vector<1x32xf32>
    %167 = math.rsqrt %166 : vector<1x32xf32>
    %168 = vector.broadcast %167 : vector<1x32xf32> to vector<32x32xf32>
    %169 = arith.mulf %164, %168 : vector<32x32xf32>
    %c0_32 = arith.constant 0 : index
    %c0_33 = arith.constant 0 : index
    %170 = vector.load %arg11[%c0_32, %c0_33] : memref<1x32xf32, #tpu.memory_space<vmem>>, vector<1x32xf32>
    %171 = vector.broadcast %170 : vector<1x32xf32> to vector<32x32xf32>
    %172 = arith.mulf %169, %171 : vector<32x32xf32>
    %c0_34 = arith.constant 0 : index
    %c0_35 = arith.constant 0 : index
    %173 = vector.load %arg12[%c0_34, %c0_35] : memref<1x32xf32, #tpu.memory_space<vmem>>, vector<1x32xf32>
    %174 = vector.broadcast %173 : vector<1x32xf32> to vector<32x32xf32>
    %175 = arith.addf %172, %174 : vector<32x32xf32>
    %c0_36 = arith.constant 0 : index
    %c0_37 = arith.constant 0 : index
    %176 = vector.load %arg2[%c0_36, %c0_37] : memref<2x8xf32, #tpu.memory_space<vmem>>, vector<2x8xf32>
    %c0_38 = arith.constant 0 : index
    %c0_39 = arith.constant 0 : index
    %177 = vector.load %arg7[%c0_38, %c0_39] : memref<8x32xf32, #tpu.memory_space<vmem>>, vector<8x32xf32>
    %cst_40 = arith.constant dense<0.000000e+00> : vector<2x32xf32>
    %178 = tpu.matmul %176, %177, %cst_40 {dimension_numbers = #tpu.dot_dimension_numbers<[1], [0], [0], [1], [0, 0, 1, 1], [], []>} : vector<2x8xf32>, vector<8x32xf32>, vector<2x32xf32> -> vector<2x32xf32>
    %c0_41 = arith.constant 0 : index
    %c0_42 = arith.constant 0 : index
    %179 = vector.load %arg8[%c0_41, %c0_42] : memref<1x32xf32, #tpu.memory_space<vmem>>, vector<1x32xf32>
    %180 = vector.broadcast %179 : vector<1x32xf32> to vector<2x32xf32>
    %181 = arith.addf %178, %180 : vector<2x32xf32>
    %182 = vector.shape_cast %181 : vector<2x32xf32> to vector<2x1x32xf32>
    %183 = vector.shape_cast %182 : vector<2x1x32xf32> to vector<2x1x32xf32>
    %184 = vector.broadcast %183 : vector<2x1x32xf32> to vector<2x16x32xf32>
    %185 = vector.shape_cast %184 : vector<2x16x32xf32> to vector<32x32xf32>
    %c0_43 = arith.constant 0 : index
    %c0_44 = arith.constant 0 : index
    %186 = vector.load %arg9[%c0_43, %c0_44] : memref<32x32xf32, #tpu.memory_space<vmem>>, vector<32x32xf32>
    %cst_45 = arith.constant dense<0.000000e+00> : vector<32x32xf32>
    %187 = tpu.matmul %175, %186, %cst_45 {dimension_numbers = #tpu.dot_dimension_numbers<[1], [0], [0], [1], [0, 0, 1, 1], [], []>} : vector<32x32xf32>, vector<32x32xf32>, vector<32x32xf32> -> vector<32x32xf32>
    %188 = arith.addf %187, %185 : vector<32x32xf32>
    %cst_46 = arith.constant 0.000000e+00 : f32
    %189 = vector.broadcast %cst_46 : f32 to vector<32x32xf32>
    %190 = arith.maximumf %188, %189 : vector<32x32xf32>
    %c0_47 = arith.constant 0 : index
    %c0_48 = arith.constant 0 : index
    %191 = vector.load %arg10[%c0_47, %c0_48] : memref<32x32xf32, #tpu.memory_space<vmem>>, vector<32x32xf32>
    %cst_49 = arith.constant dense<0.000000e+00> : vector<32x32xf32>
    %192 = tpu.matmul %190, %191, %cst_49 {dimension_numbers = #tpu.dot_dimension_numbers<[1], [0], [0], [1], [0, 0, 1, 1], [], []>} : vector<32x32xf32>, vector<32x32xf32>, vector<32x32xf32> -> vector<32x32xf32>
    %193 = arith.addf %175, %192 : vector<32x32xf32>
    %cst_50 = arith.constant dense<0.000000e+00> : vector<32xf32>
    %194 = vector.multi_reduction <add>, %193, %cst_50 [0] : vector<32x32xf32> to vector<32xf32>
    %195 = vector.shape_cast %194 : vector<32xf32> to vector<1x32xf32>
    %cst_51 = arith.constant 3.200000e+01 : f32
    %196 = vector.broadcast %cst_51 : f32 to vector<1x32xf32>
    %197 = arith.divf %195, %196 : vector<1x32xf32>
    %198 = vector.broadcast %197 : vector<1x32xf32> to vector<32x32xf32>
    %199 = arith.subf %193, %198 : vector<32x32xf32>
    %200 = arith.mulf %199, %199 : vector<32x32xf32>
    %cst_52 = arith.constant dense<0.000000e+00> : vector<32xf32>
    %201 = vector.multi_reduction <add>, %200, %cst_52 [0] : vector<32x32xf32> to vector<32xf32>
    %202 = vector.shape_cast %201 : vector<32xf32> to vector<1x32xf32>
    %cst_53 = arith.constant 3.200000e+01 : f32
    %203 = vector.broadcast %cst_53 : f32 to vector<1x32xf32>
    %204 = arith.divf %202, %203 : vector<1x32xf32>
    %205 = vector.broadcast %197 : vector<1x32xf32> to vector<32x32xf32>
    %206 = arith.subf %193, %205 : vector<32x32xf32>
    %cst_54 = arith.constant 9.99999974E-6 : f32
    %207 = vector.broadcast %cst_54 : f32 to vector<1x32xf32>
    %208 = arith.addf %204, %207 : vector<1x32xf32>
    %209 = math.rsqrt %208 : vector<1x32xf32>
    %210 = vector.broadcast %209 : vector<1x32xf32> to vector<32x32xf32>
    %211 = arith.mulf %206, %210 : vector<32x32xf32>
    %c0_55 = arith.constant 0 : index
    %c0_56 = arith.constant 0 : index
    %212 = vector.load %arg13[%c0_55, %c0_56] : memref<1x32xf32, #tpu.memory_space<vmem>>, vector<1x32xf32>
    %213 = vector.broadcast %212 : vector<1x32xf32> to vector<32x32xf32>
    %214 = arith.mulf %211, %213 : vector<32x32xf32>
    %c0_57 = arith.constant 0 : index
    %c0_58 = arith.constant 0 : index
    %215 = vector.load %arg14[%c0_57, %c0_58] : memref<1x32xf32, #tpu.memory_space<vmem>>, vector<1x32xf32>
    %216 = vector.broadcast %215 : vector<1x32xf32> to vector<32x32xf32>
    %217 = arith.addf %214, %216 : vector<32x32xf32>
    %c0_59 = arith.constant 0 : index
    %c0_60 = arith.constant 0 : index
    %218 = vector.load %arg15[%c0_59, %c0_60] : memref<32x32xf32, #tpu.memory_space<vmem>>, vector<32x32xf32>
    tpu.vector_store %arg15[%c0_59, %c0_60], %217 {strides = array<i32>} : memref<32x32xf32, #tpu.memory_space<vmem>>, vector<32x32xf32>,
    return
  }
}

</mosaic_0001>

<llo_original>
// kernel: tpu_custom_call.1
$region0: #{tpu_custom_call.1}
  #allocation0 [shape = 'u32[]', space=smem, size = 0x4, offset = 0x4, fixed_abs, tag = 'smem constant byte address 0x4 - core index']
  #allocation1 [shape = 'u32[144,128]{1,0:T(1,128)}', space=vmem, size = 0x12000, scoped, tag = 'internal scratch']
  %s0 = inlined_call_operand.vmem [shape: f32[32,32], index: 0, kind: input, shape index: {}]
  %s1 = inlined_call_operand.vmem [shape: f32[2,16], index: 1, kind: input, shape index: {}]
  %s2 = inlined_call_operand.hbm [shape: f32[2,8], index: 2, kind: input, shape index: {}]
  %s3 = inlined_call_operand.vmem [shape: f32[32,192], index: 3, kind: input, shape index: {}]
  %s4 = inlined_call_operand.hbm [shape: f32[4,64], index: 4, kind: input, shape index: {}]
  %s5 = inlined_call_operand.hbm [shape: f32[16], index: 5, kind: input, shape index: {}]
  %s6 = inlined_call_operand.vmem [shape: f32[64,32], index: 6, kind: input, shape index: {}]
  %s7 = inlined_call_operand.hbm [shape: f32[8,32], index: 7, kind: input, shape index: {}]
  %s8 = inlined_call_operand.hbm [shape: f32[1,32], index: 8, kind: input, shape index: {}]
  %s9 = inlined_call_operand.vmem [shape: f32[32,32], index: 9, kind: input, shape index: {}]
  %s10 = inlined_call_operand.hbm [shape: f32[32,32], index: 10, kind: input, shape index: {}]
  %s11 = inlined_call_operand.vmem [shape: f32[1,32], index: 11, kind: input, shape index: {}]
  %s12 = inlined_call_operand.vmem [shape: f32[1,32], index: 12, kind: input, shape index: {}]
  %s13 = inlined_call_operand.vmem [shape: f32[1,32], index: 13, kind: input, shape index: {}]
  %s14 = inlined_call_operand.vmem [shape: f32[1,32], index: 14, kind: input, shape index: {}]
  %s15 = inlined_call_operand.hbm [shape: f32[32,32], index: 15, kind: output, shape index: {}]
  %s16 = sld [smem:[#allocation0]]
  $region94: #{tpu_custom_call.1} parent=0
    _
  %s18 = ssub.s32 1, %s16
  %s19 = scalar_select 0, %s18, %s16
  $region1: #{tpu_custom_call.1} parent=0
    #allocation2 [shape = 'u8[1024]{0}', space=vmem, size = 0x400, scoped, tag = 'input window, operand 2, single buffered']
    #allocation3 [shape = 's32[1]{0}', space=sflag, size = 0x4, scoped, tag = 'scoped memory for tpu_custom_call.1']
    #allocation4 [shape = 's32[1]{0}', space=sflag, size = 0x4, scoped, tag = 'scoped memory for tpu_custom_call.1']
    #allocation5 [shape = 's32[1]{0}', space=sflag, size = 0x4, scoped, tag = 'scoped memory for tpu_custom_call.1']
    #allocation6 [shape = 'u8[2048]{0}', space=vmem, size = 0x800, scoped, tag = 'input window, operand 4, single buffered']
    #allocation7 [shape = 's32[1]{0}', space=sflag, size = 0x4, scoped, tag = 'scoped memory for tpu_custom_call.1']
    #allocation8 [shape = 'u8[512]{0}', space=smem, size = 0x200, scoped, tag = 'input window, operand 5, single buffered']
    #allocation9 [shape = 'u8[4096]{0}', space=vmem, size = 0x1000, scoped, tag = 'input window, operand 7, single buffered']
    #allocation10 [shape = 'u8[512]{0}', space=vmem, size = 0x400, scoped, tag = 'input window, operand 8, single buffered']
    #allocation11 [shape = 's32[1]{0}', space=sflag, size = 0x4, scoped, tag = 'scoped memory for tpu_custom_call.1']
    #allocation12 [shape = 'u8[16384]{0}', space=vmem, size = 0x4000, scoped, tag = 'input window, operand 10, single buffered']
    #allocation13 [shape = 'u8[16384]{0}', space=vmem, size = 0x4000, scoped, tag = 'output window, operand 0, single buffered']
    %20 = vsyncpa [#allocation3], 0
    %21 = vsyncpa [#allocation7], 0
    %22 = vsyncpa [#allocation5], 0
    %23 = vsyncpa [#allocation11], 0
    %24 = vsyncpa [#allocation4], 0
    // Predicated region
    $region2: #{tpu_custom_call.1} parent=1 // pred_check
      _
    $region3: #{tpu_custom_call.1} parent=1 // pred_check_branch
      %26 = sbr.rel (0) target = $region5
    $region4: #{tpu_custom_call.1} parent=1 // pred_region
      _
    $region5: #{tpu_custom_call.1} parent=1 // pred_fallthru
      _
    // Predicated region
    $region6: #{tpu_custom_call.1} parent=1 // pred_check
      _
    $region7: #{tpu_custom_call.1} parent=1 // pred_check_branch
      %28 = sbr.rel (0) target = $region9
    $region8: #{tpu_custom_call.1} parent=1 // pred_region
      _
    $region9: #{tpu_custom_call.1} parent=1 // pred_fallthru
      _
    // Predicated region
    $region10: #{tpu_custom_call.1} parent=1 // pred_check
      _
    $region11: #{tpu_custom_call.1} parent=1 // pred_check_branch
      %30 = sbr.rel (0) target = $region13
    $region12: #{tpu_custom_call.1} parent=1 // pred_region
      %s32 = ssub.s32 32, 32
      %33 = vsyncadd [#allocation3], %s32
      %s35 = sshll.u32 [#allocation2], 4
      %s36 = int_to_ptr.vmem [resolvable:$true] %s35
      %38 = dma.hbm_to_vmem [thread:$0]  %s2, 32, %s36, [#allocation3]
    $region13: #{tpu_custom_call.1} parent=1 // pred_fallthru
      _
    // Predicated region
    $region14: #{tpu_custom_call.1} parent=1 // pred_check
      _
    $region15: #{tpu_custom_call.1} parent=1 // pred_check_branch
      %40 = sbr.rel (0) target = $region17
    $region16: #{tpu_custom_call.1} parent=1 // pred_region
      _
    $region17: #{tpu_custom_call.1} parent=1 // pred_fallthru
      _
    // Predicated region
    $region18: #{tpu_custom_call.1} parent=1 // pred_check
      _
    $region19: #{tpu_custom_call.1} parent=1 // pred_check_branch
      %42 = sbr.rel (0) target = $region21
    $region20: #{tpu_custom_call.1} parent=1 // pred_region
      %s44 = ssub.s32 64, 64
      %45 = vsyncadd [#allocation7], %s44
      %s47 = sshll.u32 [#allocation6], 4
      %s48 = int_to_ptr.vmem [resolvable:$true] %s47
      %50 = dma.hbm_to_vmem [thread:$0]  %s4, 64, %s48, [#allocation7]
    $region21: #{tpu_custom_call.1} parent=1 // pred_fallthru
      _
    // Predicated region
    $region22: #{tpu_custom_call.1} parent=1 // pred_check
      _
    $region23: #{tpu_custom_call.1} parent=1 // pred_check_branch
      %52 = sbr.rel (0) target = $region25
    $region24: #{tpu_custom_call.1} parent=1 // pred_region
      %s54 = ssub.s32 16, 16
      %55 = vsyncadd [#allocation5], %s54
      %58 = dma.hbm_to_smem %s5, 16, [#allocation8], [#allocation5]
    $region25: #{tpu_custom_call.1} parent=1 // pred_fallthru
      _
    // Predicated region
    $region26: #{tpu_custom_call.1} parent=1 // pred_check
      _
    $region27: #{tpu_custom_call.1} parent=1 // pred_check_branch
      %60 = sbr.rel (0) target = $region29
    $region28: #{tpu_custom_call.1} parent=1 // pred_region
      _
    $region29: #{tpu_custom_call.1} parent=1 // pred_fallthru
      _
    // Predicated region
    $region30: #{tpu_custom_call.1} parent=1 // pred_check
      _
    $region31: #{tpu_custom_call.1} parent=1 // pred_check_branch
      %62 = sbr.rel (0) target = $region33
    $region32: #{tpu_custom_call.1} parent=1 // pred_region
      %s64 = ssub.s32 128, 128
      %65 = vsyncadd [#allocation7], %s64
      %s67 = sshll.u32 [#allocation9], 4
      %s68 = int_to_ptr.vmem [resolvable:$true] %s67
      %70 = dma.hbm_to_vmem [thread:$0]  %s7, 128, %s68, [#allocation7]
    $region33: #{tpu_custom_call.1} parent=1 // pred_fallthru
      _
    // Predicated region
    $region34: #{tpu_custom_call.1} parent=1 // pred_check
      _
    $region35: #{tpu_custom_call.1} parent=1 // pred_check_branch
      %72 = sbr.rel (0) target = $region37
    $region36: #{tpu_custom_call.1} parent=1 // pred_region
      %s74 = ssub.s32 16, 16
      %75 = vsyncadd [#allocation11], %s74
      %s77 = sshll.u32 [#allocation10], 4
      %s78 = int_to_ptr.vmem [resolvable:$true] %s77
      %80 = dma.hbm_to_vmem [thread:$0]  %s8, 16, %s78, [#allocation11]
    $region37: #{tpu_custom_call.1} parent=1 // pred_fallthru
      _
    // Predicated region
    $region38: #{tpu_custom_call.1} parent=1 // pred_check
      _
    $region39: #{tpu_custom_call.1} parent=1 // pred_check_branch
      %82 = sbr.rel (0) target = $region41
    $region40: #{tpu_custom_call.1} parent=1 // pred_region
      _
    $region41: #{tpu_custom_call.1} parent=1 // pred_fallthru
      _
    // Predicated region
    $region42: #{tpu_custom_call.1} parent=1 // pred_check
      _
    $region43: #{tpu_custom_call.1} parent=1 // pred_check_branch
      %84 = sbr.rel (0) target = $region45
    $region44: #{tpu_custom_call.1} parent=1 // pred_region
      %s86 = ssub.s32 512, 512
      %87 = vsyncadd [#allocation11], %s86
      %s88 = sshll.u32 [#allocation12], 4
      %s89 = int_to_ptr.vmem [resolvable:$true] %s88
      %94 = dma.hbm_to_vmem [thread:$0]  %s10, 512, %s89, [#allocation11], 128, 128, 8
    $region45: #{tpu_custom_call.1} parent=1 // pred_fallthru
      _
    // Predicated region
    $region46: #{tpu_custom_call.1} parent=1 // pred_check
      _
    $region47: #{tpu_custom_call.1} parent=1 // pred_check_branch
      %96 = sbr.rel (0) target = $region49
    $region48: #{tpu_custom_call.1} parent=1 // pred_region
      _
    $region49: #{tpu_custom_call.1} parent=1 // pred_fallthru
      _
    // Predicated region
    $region50: #{tpu_custom_call.1} parent=1 // pred_check
      _
    $region51: #{tpu_custom_call.1} parent=1 // pred_check_branch
      %98 = sbr.rel (0) target = $region53
    $region52: #{tpu_custom_call.1} parent=1 // pred_region
      _
    $region53: #{tpu_custom_call.1} parent=1 // pred_fallthru
      _
    // Predicated region
    $region54: #{tpu_custom_call.1} parent=1 // pred_check
      _
    $region55: #{tpu_custom_call.1} parent=1 // pred_check_branch
      %100 = sbr.rel (0) target = $region57
    $region56: #{tpu_custom_call.1} parent=1 // pred_region
      _
    $region57: #{tpu_custom_call.1} parent=1 // pred_fallthru
      _
    // Predicated region
    $region58: #{tpu_custom_call.1} parent=1 // pred_check
      _
    $region59: #{tpu_custom_call.1} parent=1 // pred_check_branch
      %102 = sbr.rel (0) target = $region61
    $region60: #{tpu_custom_call.1} parent=1 // pred_region
      _
    $region61: #{tpu_custom_call.1} parent=1 // pred_fallthru
      _
    // Predicated region
    $region62: #{tpu_custom_call.1} parent=1 // pred_check
      _
    $region63: #{tpu_custom_call.1} parent=1 // pred_check_branch
      %104 = sbr.rel (0) target = $region65
    $region64: #{tpu_custom_call.1} parent=1 // pred_region
      %105 = dma.done [#allocation3], 32
    $region65: #{tpu_custom_call.1} parent=1 // pred_fallthru
      _
    // Predicated region
    $region66: #{tpu_custom_call.1} parent=1 // pred_check
      _
    $region67: #{tpu_custom_call.1} parent=1 // pred_check_branch
      %107 = sbr.rel (0) target = $region69
    $region68: #{tpu_custom_call.1} parent=1 // pred_region
      %108 = dma.done [#allocation7], 64
    $region69: #{tpu_custom_call.1} parent=1 // pred_fallthru
      _
    // Predicated region
    $region70: #{tpu_custom_call.1} parent=1 // pred_check
      _
    $region71: #{tpu_custom_call.1} parent=1 // pred_check_branch
      %110 = sbr.rel (0) target = $region73
    $region72: #{tpu_custom_call.1} parent=1 // pred_region
      %111 = dma.done [#allocation5], 16
    $region73: #{tpu_custom_call.1} parent=1 // pred_fallthru
      _
    // Predicated region
    $region74: #{tpu_custom_call.1} parent=1 // pred_check
      _
    $region75: #{tpu_custom_call.1} parent=1 // pred_check_branch
      %113 = sbr.rel (0) target = $region77
    $region76: #{tpu_custom_call.1} parent=1 // pred_region
      %114 = dma.done [#allocation7], 128
    $region77: #{tpu_custom_call.1} parent=1 // pred_fallthru
      _
    // Predicated region
    $region78: #{tpu_custom_call.1} parent=1 // pred_check
      _
    $region79: #{tpu_custom_call.1} parent=1 // pred_check_branch
      %116 = sbr.rel (0) target = $region81
    $region80: #{tpu_custom_call.1} parent=1 // pred_region
      %117 = dma.done [#allocation11], 16
    $region81: #{tpu_custom_call.1} parent=1 // pred_fallthru
      _
    // Predicated region
    $region82: #{tpu_custom_call.1} parent=1 // pred_check
      _
    $region83: #{tpu_custom_call.1} parent=1 // pred_check_branch
      %119 = sbr.rel (0) target = $region85
    $region84: #{tpu_custom_call.1} parent=1 // pred_region
      %120 = dma.done [#allocation11], 512
    $region85: #{tpu_custom_call.1} parent=1 // pred_fallthru
      _
    %121 = sfence
    %v122 = vld [vmem:[%s0] sm:$0xff]
    %v123 = vld [vmem:[%s0 + $0x8] sm:$0xff]
    %v124 = vld [vmem:[%s0 + $0x10] sm:$0xff]
    %v125 = vld [vmem:[%s0 + $0x18] sm:$0xff]
    %v126 = vld [vmem:[%s3] sm:$0xff]
    %v127 = vld [vmem:[%s3 + $0x8] sm:$0xff]
    %v128 = vld [vmem:[%s3 + $0x10] sm:$0xff]
    %v129 = vld [vmem:[%s3 + $0x18] sm:$0xff]
    %v130 = vld [vmem:[%s3 + $0x20] sm:$0xff]
    %v131 = vld [vmem:[%s3 + $0x28] sm:$0xff]
    %v132 = vld [vmem:[%s3 + $0x30] sm:$0xff]
    %v133 = vld [vmem:[%s3 + $0x38] sm:$0xff]
    %vm134 = vcmask 261120
    %v136 = vsel %vm134, %v122, 0
    %v139 = vsel %vm134, %v123, 0
    %v142 = vsel %vm134, %v124, 0
    %v145 = vsel %vm134, %v125, 0
    %147 = vmatprep.subr.mxu0 %v127
    %148 = vmatpush1.msra.mxu0 %v126
    %149 = vmatprep.subr.mxu0 %v129
    %150 = vmatpush1.msra.mxu0 %v128
    %151 = vmatprep.subr.mxu0 %v131
    %152 = vmatpush1.msra.mxu0 %v130
    %153 = vmatprep.subr.mxu0 %v133
    %154 = vmatpush1.msra.mxu0 %v132
    %155 = vmatprep.subr.mxu0 0.0
    %156 = vmatpush1.msra.mxu0 0.0
    %157 = vmatprep.subr.mxu0 0.0
    %158 = vmatpush1.msra.mxu0 0.0
    %159 = vmatprep.subr.mxu0 0.0
    %160 = vmatpush1.msra.mxu0 0.0
    %161 = vmatprep.subr.mxu0 0.0
    %162 = vmatpush1.msra.mxu0 0.0
    %163 = vmatprep.subr.mxu0 0.0
    %164 = vmatpush1.msra.mxu0 0.0
    %165 = vmatprep.subr.mxu0 0.0
    %166 = vmatpush1.msra.mxu0 0.0
    %167 = vmatprep.subr.mxu0 0.0
    %168 = vmatpush1.msra.mxu0 0.0
    %169 = vmatprep.subr.mxu0 0.0
    %170 = vmatpush1.msra.mxu0 0.0
    %171 = vmatprep.subr.mxu0 0.0
    %172 = vmatpush1.msra.mxu0 0.0
    %173 = vmatprep.subr.mxu0 0.0
    %174 = vmatpush1.msra.mxu0 0.0
    %175 = vmatprep.subr.mxu0 0.0
    %176 = vmatpush1.msra.mxu0 0.0
    %177 = vmatprep.subr.mxu0 0.0
    %178 = vmatpush1.msra.mxu0 0.0
    %179 = vmatprep.subr.mxu0 0.0
    %180 = vmatpush1.msra.mxu0 0.0
    %181 = vmatprep.subr.mxu0 0.0
    %182 = vmatpush1.msra.mxu0 0.0
    %183 = vmatprep.subr.mxu0 0.0
    %184 = vmatpush1.msra.mxu0 0.0
    %185 = vmatprep.subr.mxu0 0.0
    %186 = vmatpush1.msra.mxu0 0.0
    %187 = vmatprep.subr.mxu0 0.0
    %188 = vmatpush1.msra.mxu0 0.0
    %189 = vmatprep.subr.mxu0 0.0
    %190 = vmatpush1.msra.mxu0 0.0
    %191 = vmatprep.subr.mxu0 0.0
    %192 = vmatpush1.msra.mxu0 0.0
    %193 = vmatprep.subr.mxu0 0.0
    %194 = vmatpush1.msra.mxu0 0.0
    %195 = vmatprep.subr.mxu0 0.0
    %196 = vmatpush1.msra.mxu0 0.0
    %197 = vmatprep.subr.mxu0 0.0
    %198 = vmatpush1.msra.mxu0 0.0
    %199 = vmatprep.subr.mxu0 0.0
    %200 = vmatpush1.msra.mxu0 0.0
    %201 = vmatprep.subr.mxu0 0.0
    %202 = vmatpush1.msra.mxu0 0.0
    %203 = vmatprep.subr.mxu0 0.0
    %204 = vmatpush1.msra.mxu0 0.0
    %205 = vmatprep.subr.mxu0 0.0
    %206 = vmatpush1.msra.mxu0 0.0
    %207 = vmatprep.subr.mxu0 0.0
    %208 = vmatpush1.msra.mxu0 0.0
    %209 = vmatprep.subr.mxu0 0.0
    %210 = vmatpush1.msra.mxu0 0.0
    %211 = vmatprep.mubr.f32.mxu0 0.0
    %212 = vmatmul.mubr.f32.gmra.mrb[0].mxu0 %v136
    %v213 = vpop.f32.mrb[0].mxu0
    %v214 = vadd.f32 0.0, %v213
    %v215 = vpop.f32.mrb[0].mxu0
    %v216 = vadd.f32 0.0, %v215
    %217 = vmatprep.mubr.f32.mxu0 0.0
    %218 = vmatmul.mubr.f32.gmra.mrb[0].mxu0 %v139
    %v219 = vpop.f32.mrb[0].mxu0
    %v220 = vadd.f32 0.0, %v219
    %v221 = vpop.f32.mrb[0].mxu0
    %v222 = vadd.f32 0.0, %v221
    %223 = vmatprep.mubr.f32.mxu0 0.0
    %224 = vmatmul.mubr.f32.gmra.mrb[0].mxu0 %v142
    %v225 = vpop.f32.mrb[0].mxu0
    %v226 = vadd.f32 0.0, %v225
    %v227 = vpop.f32.mrb[0].mxu0
    %v228 = vadd.f32 0.0, %v227
    %229 = vmatprep.mubr.f32.mxu0 0.0
    %230 = vmatmul.mubr.f32.gmra.mrb[0].mxu0 %v145
    %v231 = vpop.f32.mrb[0].mxu0
    %v232 = vadd.f32 0.0, %v231
    %v233 = vpop.f32.mrb[0].mxu0
    %v234 = vadd.f32 0.0, %v233
    %235 = vdwg.mxu0
    %v236 = vld [vmem:[#allocation6] sm:$0xf]
    %v237 = vld [vmem:[%s1] sm:$0x3]
    %v240 = vunpack.c.l.s4 1966171168
    %v241 = vunpack.c.0.s8 %v240
    %v242 = vlaneseq
    %v243 = vshrl.u32 %v242, 7
    %v244 = vsub.s32 %v241, %v243
    %v245 = vrot.slane %v237, %v244
    %v246 = vcombine.high %v245, %v245
    %v248 = vunpack.c.l.s4 1966171168
    %v249 = vunpack.c.0.s8 %v248
    %v250 = vlaneseq
    %v251 = vshrl.u32 %v250, 7
    %v252 = vsub.s32 %v249, %v251
    %v253 = vrot.slane %v245, %v252
    %v255 = vunpack.c.l.s4 1966171168
    %v256 = vunpack.c.0.s8 %v255
    %v257 = vlaneseq
    %v258 = vshrl.u32 %v257, 7
    %v259 = vsub.s32 %v256, %v258
    %v260 = vrot.slane %v246, %v259
    %v261 = vlaneseq
    %v262 = vshrl.u32 %v261, 7
    %v263 = vsub.s32 0, %v262
    %v264 = vrot.slane %v253, %v263
    %v265 = vlaneseq
    %v266 = vshrl.u32 %v265, 7
    %v267 = vsub.s32 0, %v266
    %v268 = vrot.slane %v260, %v267
    %v271 = vlaneseq
    %v272 = vshrl.u32 %v271, 7
    %v273 = vsub.s32 0, %v272
    %v274 = vrot.slane %v236, %v273
    %v275 = vmul.f32 %v214, %v274
    %v276 = vmul.f32 %v220, %v274
    %v277 = vmul.f32 %v226, %v274
    %v278 = vmul.f32 %v232, %v274
    %281 = vrot.lane.b32.xlu0 %v214, 64
    %v282 = vpop.permute.xlu0 %281
    %283 = vrot.lane.b32.xlu0 %v220, 64
    %v284 = vpop.permute.xlu0 %283
    %vm285 = vcmask 523264
    %v287 = vsel %vm285, %v275, 0
    %v290 = vsel %vm285, %v276, 0
    %v292 = vsel %vm285, %v282, 0
    %v294 = vsel %vm285, %v284, 0
    %296 = vmatprep.subr.mxu0 0.0
    %297 = vmatpush1.xpose.msra.mxu0 %v292
    %298 = vmatprep.subr.mxu0 0.0
    %299 = vmatpush1.xpose.msra.mxu0 %v294
    %300 = vmatprep.subr.mxu0 0.0
    %301 = vmatpush1.xpose.msra.mxu0 0.0
    %302 = vmatprep.subr.mxu0 0.0
    %303 = vmatpush1.xpose.msra.mxu0 0.0
    %304 = vmatprep.subr.mxu0 0.0
    %305 = vmatpush1.xpose.msra.mxu0 0.0
    %306 = vmatprep.subr.mxu0 0.0
    %307 = vmatpush1.xpose.msra.mxu0 0.0
    %308 = vmatprep.subr.mxu0 0.0
    %309 = vmatpush1.xpose.msra.mxu0 0.0
    %310 = vmatprep.subr.mxu0 0.0
    %311 = vmatpush1.xpose.msra.mxu0 0.0
    %312 = vmatprep.subr.mxu0 0.0
    %313 = vmatpush1.xpose.msra.mxu0 0.0
    %314 = vmatprep.subr.mxu0 0.0
    %315 = vmatpush1.xpose.msra.mxu0 0.0
    %316 = vmatprep.subr.mxu0 0.0
    %317 = vmatpush1.xpose.msra.mxu0 0.0
    %318 = vmatprep.subr.mxu0 0.0
    %319 = vmatpush1.xpose.msra.mxu0 0.0
    %320 = vmatprep.subr.mxu0 0.0
    %321 = vmatpush1.xpose.msra.mxu0 0.0
    %322 = vmatprep.subr.mxu0 0.0
    %323 = vmatpush1.xpose.msra.mxu0 0.0
    %324 = vmatprep.subr.mxu0 0.0
    %325 = vmatpush1.xpose.msra.mxu0 0.0
    %326 = vmatprep.subr.mxu0 0.0
    %327 = vmatpush1.xpose.msra.mxu0 0.0
    %328 = vmatprep.subr.mxu0 0.0
    %329 = vmatpush1.xpose.msra.mxu0 0.0
    %330 = vmatprep.subr.mxu0 0.0
    %331 = vmatpush1.xpose.msra.mxu0 0.0
    %332 = vmatprep.subr.mxu0 0.0
    %333 = vmatpush1.xpose.msra.mxu0 0.0
    %334 = vmatprep.subr.mxu0 0.0
    %335 = vmatpush1.xpose.msra.mxu0 0.0
    %336 = vmatprep.subr.mxu0 0.0
    %337 = vmatpush1.xpose.msra.mxu0 0.0
    %338 = vmatprep.subr.mxu0 0.0
    %339 = vmatpush1.xpose.msra.mxu0 0.0
    %340 = vmatprep.subr.mxu0 0.0
    %341 = vmatpush1.xpose.msra.mxu0 0.0
    %342 = vmatprep.subr.mxu0 0.0
    %343 = vmatpush1.xpose.msra.mxu0 0.0
    %344 = vmatprep.subr.mxu0 0.0
    %345 = vmatpush1.xpose.msra.mxu0 0.0
    %346 = vmatprep.subr.mxu0 0.0
    %347 = vmatpush1.xpose.msra.mxu0 0.0
    %348 = vmatprep.subr.mxu0 0.0
    %349 = vmatpush1.xpose.msra.mxu0 0.0
    %350 = vmatprep.subr.mxu0 0.0
    %351 = vmatpush1.xpose.msra.mxu0 0.0
    %352 = vmatprep.subr.mxu0 0.0
    %353 = vmatpush1.xpose.msra.mxu0 0.0
    %354 = vmatprep.subr.mxu0 0.0
    %355 = vmatpush1.xpose.msra.mxu0 0.0
    %356 = vmatprep.subr.mxu0 0.0
    %357 = vmatpush1.xpose.msra.mxu0 0.0
    %358 = vmatprep.subr.mxu0 0.0
    %359 = vmatpush1.xpose.msra.mxu0 0.0
    %360 = vmatprep.mubr.f32.mxu0 0.0
    %361 = vmatmul.mubr.f32.gmra.mrb[0].mxu0 %v287
    %v362 = vpop.f32.mrb[0].mxu0
    %v363 = vadd.f32 0.0, %v362
    %v364 = vpop.f32.mrb[0].mxu0
    %365 = vmatprep.mubr.f32.mxu0 0.0
    %366 = vmatmul.mubr.f32.gmra.mrb[0].mxu0 %v290
    %v367 = vpop.f32.mrb[0].mxu0
    %v368 = vadd.f32 0.0, %v367
    %v369 = vpop.f32.mrb[0].mxu0
    %370 = vdwg.mxu0
    %373 = vrot.lane.b32.xlu0 %v226, 64
    %v374 = vpop.permute.xlu0 %373
    %375 = vrot.lane.b32.xlu0 %v232, 64
    %v376 = vpop.permute.xlu0 %375
    %v378 = vsel %vm285, %v277, 0
    %v381 = vsel %vm285, %v278, 0
    %v383 = vsel %vm285, %v374, 0
    %v385 = vsel %vm285, %v376, 0
    %387 = vmatprep.subr.mxu0 0.0
    %388 = vmatpush1.xpose.msra.mxu0 %v383
    %389 = vmatprep.subr.mxu0 0.0
    %390 = vmatpush1.xpose.msra.mxu0 %v385
    %391 = vmatprep.subr.mxu0 0.0
    %392 = vmatpush1.xpose.msra.mxu0 0.0
    %393 = vmatprep.subr.mxu0 0.0
    %394 = vmatpush1.xpose.msra.mxu0 0.0
    %395 = vmatprep.subr.mxu0 0.0
    %396 = vmatpush1.xpose.msra.mxu0 0.0
    %397 = vmatprep.subr.mxu0 0.0
    %398 = vmatpush1.xpose.msra.mxu0 0.0
    %399 = vmatprep.subr.mxu0 0.0
    %400 = vmatpush1.xpose.msra.mxu0 0.0
    %401 = vmatprep.subr.mxu0 0.0
    %402 = vmatpush1.xpose.msra.mxu0 0.0
    %403 = vmatprep.subr.mxu0 0.0
    %404 = vmatpush1.xpose.msra.mxu0 0.0
    %405 = vmatprep.subr.mxu0 0.0
    %406 = vmatpush1.xpose.msra.mxu0 0.0
    %407 = vmatprep.subr.mxu0 0.0
    %408 = vmatpush1.xpose.msra.mxu0 0.0
    %409 = vmatprep.subr.mxu0 0.0
    %410 = vmatpush1.xpose.msra.mxu0 0.0
    %411 = vmatprep.subr.mxu0 0.0
    %412 = vmatpush1.xpose.msra.mxu0 0.0
    %413 = vmatprep.subr.mxu0 0.0
    %414 = vmatpush1.xpose.msra.mxu0 0.0
    %415 = vmatprep.subr.mxu0 0.0
    %416 = vmatpush1.xpose.msra.mxu0 0.0
    %417 = vmatprep.subr.mxu0 0.0
    %418 = vmatpush1.xpose.msra.mxu0 0.0
    %419 = vmatprep.subr.mxu0 0.0
    %420 = vmatpush1.xpose.msra.mxu0 0.0
    %421 = vmatprep.subr.mxu0 0.0
    %422 = vmatpush1.xpose.msra.mxu0 0.0
    %423 = vmatprep.subr.mxu0 0.0
    %424 = vmatpush1.xpose.msra.mxu0 0.0
    %425 = vmatprep.subr.mxu0 0.0
    %426 = vmatpush1.xpose.msra.mxu0 0.0
    %427 = vmatprep.subr.mxu0 0.0
    %428 = vmatpush1.xpose.msra.mxu0 0.0
    %429 = vmatprep.subr.mxu0 0.0
    %430 = vmatpush1.xpose.msra.mxu0 0.0
    %431 = vmatprep.subr.mxu0 0.0
    %432 = vmatpush1.xpose.msra.mxu0 0.0
    %433 = vmatprep.subr.mxu0 0.0
    %434 = vmatpush1.xpose.msra.mxu0 0.0
    %435 = vmatprep.subr.mxu0 0.0
    %436 = vmatpush1.xpose.msra.mxu0 0.0
    %437 = vmatprep.subr.mxu0 0.0
    %438 = vmatpush1.xpose.msra.mxu0 0.0
    %439 = vmatprep.subr.mxu0 0.0
    %440 = vmatpush1.xpose.msra.mxu0 0.0
    %441 = vmatprep.subr.mxu0 0.0
    %442 = vmatpush1.xpose.msra.mxu0 0.0
    %443 = vmatprep.subr.mxu0 0.0
    %444 = vmatpush1.xpose.msra.mxu0 0.0
    %445 = vmatprep.subr.mxu0 0.0
    %446 = vmatpush1.xpose.msra.mxu0 0.0
    %447 = vmatprep.subr.mxu0 0.0
    %448 = vmatpush1.xpose.msra.mxu0 0.0
    %449 = vmatprep.subr.mxu0 0.0
    %450 = vmatpush1.xpose.msra.mxu0 0.0
    %451 = vmatprep.mubr.f32.mxu0 0.0
    %452 = vmatmul.mubr.f32.gmra.mrb[0].mxu0 %v378
    %v453 = vpop.f32.mrb[0].mxu0
    %v454 = vadd.f32 0.0, %v453
    %v455 = vpop.f32.mrb[0].mxu0
    %456 = vmatprep.mubr.f32.mxu0 0.0
    %457 = vmatmul.mubr.f32.gmra.mrb[0].mxu0 %v381
    %v458 = vpop.f32.mrb[0].mxu0
    %v459 = vadd.f32 0.0, %v458
    %v460 = vpop.f32.mrb[0].mxu0
    %461 = vdwg.mxu0
    %v462 = vsub.f32 %v363, %v264
    %v463 = vsub.f32 %v368, %v264
    %v464 = vsub.f32 %v454, %v268
    %v465 = vsub.f32 %v459, %v268
    %vm466 = vcmask 130048
    %v467 = vsel %vm466, %v462, -inf
    %468 = vmax.xlane.f32.xlu0 %v467
    %v469 = vpop.xlane.xlu0 %468
    %v470 = vsel %vm466, %v463, -inf
    %471 = vmax.xlane.f32.xlu0 %v470
    %v472 = vpop.xlane.xlu0 %471
    %v473 = vsel %vm466, %v464, -inf
    %474 = vmax.xlane.f32.xlu0 %v473
    %v475 = vpop.xlane.xlu0 %474
    %v476 = vsel %vm466, %v465, -inf
    %477 = vmax.xlane.f32.xlu0 %v476
    %v478 = vpop.xlane.xlu0 %477
    %v479 = vsub.f32 %v462, %v469
    %v480 = vsub.f32 %v463, %v472
    %v481 = vsub.f32 %v464, %v475
    %v482 = vsub.f32 %v465, %v478
    %v483 = vmul.f32 %v479, 1.442695
    %v484 = vpow.pop %v483
    %v485 = vmul.f32 %v480, 1.442695
    %v486 = vpow.pop %v485
    %v487 = vmul.f32 %v481, 1.442695
    %v488 = vpow.pop %v487
    %v489 = vmul.f32 %v482, 1.442695
    %v490 = vpow.pop %v489
    %v491 = vsel %vm466, %v484, 0.0
    %492 = vadd.xlane.f32.xlu0 %v491
    %v493 = vpop.xlane.xlu0 %492
    %v494 = vsel %vm466, %v486, 0.0
    %495 = vadd.xlane.f32.xlu0 %v494
    %v496 = vpop.xlane.xlu0 %495
    %v497 = vsel %vm466, %v488, 0.0
    %498 = vadd.xlane.f32.xlu0 %v497
    %v499 = vpop.xlane.xlu0 %498
    %v500 = vsel %vm466, %v490, 0.0
    %501 = vadd.xlane.f32.xlu0 %v500
    %v502 = vpop.xlane.xlu0 %501
    %v503 = vrcp.pop %v493
    %v504 = vrcp.pop %v496
    %v505 = vrcp.pop %v499
    %v506 = vrcp.pop %v502
    %v507 = vmul.f32 %v484, %v503
    %v508 = vmul.f32 %v486, %v504
    %v509 = vmul.f32 %v488, %v505
    %v510 = vmul.f32 %v490, %v506
    %v511 = vlaneseq
    %v512 = vshrl.u32 %v511, 7
    %v513 = vsub.s32 1, %v512
    %v514 = vrot.slane %v236, %v513
    %v515 = vmul.f32 %v214, %v514
    %v516 = vmul.f32 %v220, %v514
    %v517 = vmul.f32 %v226, %v514
    %v518 = vmul.f32 %v232, %v514
    %v520 = vsel %vm285, %v515, 0
    %v523 = vsel %vm285, %v516, 0
    %525 = vmatprep.subr.mxu0 0.0
    %526 = vmatpush1.xpose.msra.mxu0 %v292
    %527 = vmatprep.subr.mxu0 0.0
    %528 = vmatpush1.xpose.msra.mxu0 %v294
    %529 = vmatprep.subr.mxu0 0.0
    %530 = vmatpush1.xpose.msra.mxu0 0.0
    %531 = vmatprep.subr.mxu0 0.0
    %532 = vmatpush1.xpose.msra.mxu0 0.0
    %533 = vmatprep.subr.mxu0 0.0
    %534 = vmatpush1.xpose.msra.mxu0 0.0
    %535 = vmatprep.subr.mxu0 0.0
    %536 = vmatpush1.xpose.msra.mxu0 0.0
    %537 = vmatprep.subr.mxu0 0.0
    %538 = vmatpush1.xpose.msra.mxu0 0.0
    %539 = vmatprep.subr.mxu0 0.0
    %540 = vmatpush1.xpose.msra.mxu0 0.0
    %541 = vmatprep.subr.mxu0 0.0
    %542 = vmatpush1.xpose.msra.mxu0 0.0
    %543 = vmatprep.subr.mxu0 0.0
    %544 = vmatpush1.xpose.msra.mxu0 0.0
    %545 = vmatprep.subr.mxu0 0.0
    %546 = vmatpush1.xpose.msra.mxu0 0.0
    %547 = vmatprep.subr.mxu0 0.0
    %548 = vmatpush1.xpose.msra.mxu0 0.0
    %549 = vmatprep.subr.mxu0 0.0
    %550 = vmatpush1.xpose.msra.mxu0 0.0
    %551 = vmatprep.subr.mxu0 0.0
    %552 = vmatpush1.xpose.msra.mxu0 0.0
    %553 = vmatprep.subr.mxu0 0.0
    %554 = vmatpush1.xpose.msra.mxu0 0.0
    %555 = vmatprep.subr.mxu0 0.0
    %556 = vmatpush1.xpose.msra.mxu0 0.0
    %557 = vmatprep.subr.mxu0 0.0
    %558 = vmatpush1.xpose.msra.mxu0 0.0
    %559 = vmatprep.subr.mxu0 0.0
    %560 = vmatpush1.xpose.msra.mxu0 0.0
    %561 = vmatprep.subr.mxu0 0.0
    %562 = vmatpush1.xpose.msra.mxu0 0.0
    %563 = vmatprep.subr.mxu0 0.0
    %564 = vmatpush1.xpose.msra.mxu0 0.0
    %565 = vmatprep.subr.mxu0 0.0
    %566 = vmatpush1.xpose.msra.mxu0 0.0
    %567 = vmatprep.subr.mxu0 0.0
    %568 = vmatpush1.xpose.msra.mxu0 0.0
    %569 = vmatprep.subr.mxu0 0.0
    %570 = vmatpush1.xpose.msra.mxu0 0.0
    %571 = vmatprep.subr.mxu0 0.0
    %572 = vmatpush1.xpose.msra.mxu0 0.0
    %573 = vmatprep.subr.mxu0 0.0
    %574 = vmatpush1.xpose.msra.mxu0 0.0
    %575 = vmatprep.subr.mxu0 0.0
    %576 = vmatpush1.xpose.msra.mxu0 0.0
    %577 = vmatprep.subr.mxu0 0.0
    %578 = vmatpush1.xpose.msra.mxu0 0.0
    %579 = vmatprep.subr.mxu0 0.0
    %580 = vmatpush1.xpose.msra.mxu0 0.0
    %581 = vmatprep.subr.mxu0 0.0
    %582 = vmatpush1.xpose.msra.mxu0 0.0
    %583 = vmatprep.subr.mxu0 0.0
    %584 = vmatpush1.xpose.msra.mxu0 0.0
    %585 = vmatprep.subr.mxu0 0.0
    %586 = vmatpush1.xpose.msra.mxu0 0.0
    %587 = vmatprep.subr.mxu0 0.0
    %588 = vmatpush1.xpose.msra.mxu0 0.0
    %589 = vmatprep.mubr.f32.mxu0 0.0
    %590 = vmatmul.mubr.f32.gmra.mrb[0].mxu0 %v520
    %v591 = vpop.f32.mrb[0].mxu0
    %v592 = vadd.f32 0.0, %v591
    %v593 = vpop.f32.mrb[0].mxu0
    %594 = vmatprep.mubr.f32.mxu0 0.0
    %595 = vmatmul.mubr.f32.gmra.mrb[0].mxu0 %v523
    %v596 = vpop.f32.mrb[0].mxu0
    %v597 = vadd.f32 0.0, %v596
    %v598 = vpop.f32.mrb[0].mxu0
    %599 = vdwg.mxu0
    %v601 = vsel %vm285, %v517, 0
    %v604 = vsel %vm285, %v518, 0
    %606 = vmatprep.subr.mxu0 0.0
    %607 = vmatpush1.xpose.msra.mxu0 %v383
    %608 = vmatprep.subr.mxu0 0.0
    %609 = vmatpush1.xpose.msra.mxu0 %v385
    %610 = vmatprep.subr.mxu0 0.0
    %611 = vmatpush1.xpose.msra.mxu0 0.0
    %612 = vmatprep.subr.mxu0 0.0
    %613 = vmatpush1.xpose.msra.mxu0 0.0
    %614 = vmatprep.subr.mxu0 0.0
    %615 = vmatpush1.xpose.msra.mxu0 0.0
    %616 = vmatprep.subr.mxu0 0.0
    %617 = vmatpush1.xpose.msra.mxu0 0.0
    %618 = vmatprep.subr.mxu0 0.0
    %619 = vmatpush1.xpose.msra.mxu0 0.0
    %620 = vmatprep.subr.mxu0 0.0
    %621 = vmatpush1.xpose.msra.mxu0 0.0
    %622 = vmatprep.subr.mxu0 0.0
    %623 = vmatpush1.xpose.msra.mxu0 0.0
    %624 = vmatprep.subr.mxu0 0.0
    %625 = vmatpush1.xpose.msra.mxu0 0.0
    %626 = vmatprep.subr.mxu0 0.0
    %627 = vmatpush1.xpose.msra.mxu0 0.0
    %628 = vmatprep.subr.mxu0 0.0
    %629 = vmatpush1.xpose.msra.mxu0 0.0
    %630 = vmatprep.subr.mxu0 0.0
    %631 = vmatpush1.xpose.msra.mxu0 0.0
    %632 = vmatprep.subr.mxu0 0.0
    %633 = vmatpush1.xpose.msra.mxu0 0.0
    %634 = vmatprep.subr.mxu0 0.0
    %635 = vmatpush1.xpose.msra.mxu0 0.0
    %636 = vmatprep.subr.mxu0 0.0
    %637 = vmatpush1.xpose.msra.mxu0 0.0
    %638 = vmatprep.subr.mxu0 0.0
    %639 = vmatpush1.xpose.msra.mxu0 0.0
    %640 = vmatprep.subr.mxu0 0.0
    %641 = vmatpush1.xpose.msra.mxu0 0.0
    %642 = vmatprep.subr.mxu0 0.0
    %643 = vmatpush1.xpose.msra.mxu0 0.0
    %644 = vmatprep.subr.mxu0 0.0
    %645 = vmatpush1.xpose.msra.mxu0 0.0
    %646 = vmatprep.subr.mxu0 0.0
    %647 = vmatpush1.xpose.msra.mxu0 0.0
    %648 = vmatprep.subr.mxu0 0.0
    %649 = vmatpush1.xpose.msra.mxu0 0.0
    %650 = vmatprep.subr.mxu0 0.0
    %651 = vmatpush1.xpose.msra.mxu0 0.0
    %652 = vmatprep.subr.mxu0 0.0
    %653 = vmatpush1.xpose.msra.mxu0 0.0
    %654 = vmatprep.subr.mxu0 0.0
    %655 = vmatpush1.xpose.msra.mxu0 0.0
    %656 = vmatprep.subr.mxu0 0.0
    %657 = vmatpush1.xpose.msra.mxu0 0.0
    %658 = vmatprep.subr.mxu0 0.0
    %659 = vmatpush1.xpose.msra.mxu0 0.0
    %660 = vmatprep.subr.mxu0 0.0
    %661 = vmatpush1.xpose.msra.mxu0 0.0
    %662 = vmatprep.subr.mxu0 0.0
    %663 = vmatpush1.xpose.msra.mxu0 0.0
    %664 = vmatprep.subr.mxu0 0.0
    %665 = vmatpush1.xpose.msra.mxu0 0.0
    %666 = vmatprep.subr.mxu0 0.0
    %667 = vmatpush1.xpose.msra.mxu0 0.0
    %668 = vmatprep.subr.mxu0 0.0
    %669 = vmatpush1.xpose.msra.mxu0 0.0
    %670 = vmatprep.mubr.f32.mxu0 0.0
    %671 = vmatmul.mubr.f32.gmra.mrb[0].mxu0 %v601
    %v672 = vpop.f32.mrb[0].mxu0
    %v673 = vadd.f32 0.0, %v672
    %v674 = vpop.f32.mrb[0].mxu0
    %675 = vmatprep.mubr.f32.mxu0 0.0
    %676 = vmatmul.mubr.f32.gmra.mrb[0].mxu0 %v604
    %v677 = vpop.f32.mrb[0].mxu0
    %v678 = vadd.f32 0.0, %v677
    %v679 = vpop.f32.mrb[0].mxu0
    %680 = vdwg.mxu0
    %v681 = vsub.f32 %v592, %v264
    %v682 = vsub.f32 %v597, %v264
    %v683 = vsub.f32 %v673, %v268
    %v684 = vsub.f32 %v678, %v268
    %v685 = vsel %vm466, %v681, -inf
    %686 = vmax.xlane.f32.xlu0 %v685
    %v687 = vpop.xlane.xlu0 %686
    %v688 = vsel %vm466, %v682, -inf
    %689 = vmax.xlane.f32.xlu0 %v688
    %v690 = vpop.xlane.xlu0 %689
    %v691 = vsel %vm466, %v683, -inf
    %692 = vmax.xlane.f32.xlu0 %v691
    %v693 = vpop.xlane.xlu0 %692
    %v694 = vsel %vm466, %v684, -inf
    %695 = vmax.xlane.f32.xlu0 %v694
    %v696 = vpop.xlane.xlu0 %695
    %v697 = vsub.f32 %v681, %v687
    %v698 = vsub.f32 %v682, %v690
    %v699 = vsub.f32 %v683, %v693
    %v700 = vsub.f32 %v684, %v696
    %v701 = vmul.f32 %v697, 1.442695
    %v702 = vpow.pop %v701
    %v703 = vmul.f32 %v698, 1.442695
    %v704 = vpow.pop %v703
    %v705 = vmul.f32 %v699, 1.442695
    %v706 = vpow.pop %v705
    %v707 = vmul.f32 %v700, 1.442695
    %v708 = vpow.pop %v707
    %v709 = vsel %vm466, %v702, 0.0
    %710 = vadd.xlane.f32.xlu0 %v709
    %v711 = vpop.xlane.xlu0 %710
    %v712 = vsel %vm466, %v704, 0.0
    %713 = vadd.xlane.f32.xlu0 %v712
    %v714 = vpop.xlane.xlu0 %713
    %v715 = vsel %vm466, %v706, 0.0
    %716 = vadd.xlane.f32.xlu0 %v715
    %v717 = vpop.xlane.xlu0 %716
    %v718 = vsel %vm466, %v708, 0.0
    %719 = vadd.xlane.f32.xlu0 %v718
    %v720 = vpop.xlane.xlu0 %719
    %v721 = vrcp.pop %v711
    %v722 = vrcp.pop %v714
    %v723 = vrcp.pop %v717
    %v724 = vrcp.pop %v720
    %v725 = vmul.f32 %v702, %v721
    %v726 = vmul.f32 %v704, %v722
    %v727 = vmul.f32 %v706, %v723
    %v728 = vmul.f32 %v708, %v724
    %v729 = vlaneseq
    %v730 = vshrl.u32 %v729, 7
    %v731 = vsub.s32 2, %v730
    %v732 = vrot.slane %v236, %v731
    %v733 = vmul.f32 %v214, %v732
    %v734 = vmul.f32 %v220, %v732
    %v735 = vmul.f32 %v226, %v732
    %v736 = vmul.f32 %v232, %v732
    %v738 = vsel %vm285, %v733, 0
    %v741 = vsel %vm285, %v734, 0
    %743 = vmatprep.subr.mxu0 0.0
    %744 = vmatpush1.xpose.msra.mxu0 %v292
    %745 = vmatprep.subr.mxu0 0.0
    %746 = vmatpush1.xpose.msra.mxu0 %v294
    %747 = vmatprep.subr.mxu0 0.0
    %748 = vmatpush1.xpose.msra.mxu0 0.0
    %749 = vmatprep.subr.mxu0 0.0
    %750 = vmatpush1.xpose.msra.mxu0 0.0
    %751 = vmatprep.subr.mxu0 0.0
    %752 = vmatpush1.xpose.msra.mxu0 0.0
    %753 = vmatprep.subr.mxu0 0.0
    %754 = vmatpush1.xpose.msra.mxu0 0.0
    %755 = vmatprep.subr.mxu0 0.0
    %756 = vmatpush1.xpose.msra.mxu0 0.0
    %757 = vmatprep.subr.mxu0 0.0
    %758 = vmatpush1.xpose.msra.mxu0 0.0
    %759 = vmatprep.subr.mxu0 0.0
    %760 = vmatpush1.xpose.msra.mxu0 0.0
    %761 = vmatprep.subr.mxu0 0.0
    %762 = vmatpush1.xpose.msra.mxu0 0.0
    %763 = vmatprep.subr.mxu0 0.0
    %764 = vmatpush1.xpose.msra.mxu0 0.0
    %765 = vmatprep.subr.mxu0 0.0
    %766 = vmatpush1.xpose.msra.mxu0 0.0
    %767 = vmatprep.subr.mxu0 0.0
    %768 = vmatpush1.xpose.msra.mxu0 0.0
    %769 = vmatprep.subr.mxu0 0.0
    %770 = vmatpush1.xpose.msra.mxu0 0.0
    %771 = vmatprep.subr.mxu0 0.0
    %772 = vmatpush1.xpose.msra.mxu0 0.0
    %773 = vmatprep.subr.mxu0 0.0
    %774 = vmatpush1.xpose.msra.mxu0 0.0
    %775 = vmatprep.subr.mxu0 0.0
    %776 = vmatpush1.xpose.msra.mxu0 0.0
    %777 = vmatprep.subr.mxu0 0.0
    %778 = vmatpush1.xpose.msra.mxu0 0.0
    %779 = vmatprep.subr.mxu0 0.0
    %780 = vmatpush1.xpose.msra.mxu0 0.0
    %781 = vmatprep.subr.mxu0 0.0
    %782 = vmatpush1.xpose.msra.mxu0 0.0
    %783 = vmatprep.subr.mxu0 0.0
    %784 = vmatpush1.xpose.msra.mxu0 0.0
    %785 = vmatprep.subr.mxu0 0.0
    %786 = vmatpush1.xpose.msra.mxu0 0.0
    %787 = vmatprep.subr.mxu0 0.0
    %788 = vmatpush1.xpose.msra.mxu0 0.0
    %789 = vmatprep.subr.mxu0 0.0
    %790 = vmatpush1.xpose.msra.mxu0 0.0
    %791 = vmatprep.subr.mxu0 0.0
    %792 = vmatpush1.xpose.msra.mxu0 0.0
    %793 = vmatprep.subr.mxu0 0.0
    %794 = vmatpush1.xpose.msra.mxu0 0.0
    %795 = vmatprep.subr.mxu0 0.0
    %796 = vmatpush1.xpose.msra.mxu0 0.0
    %797 = vmatprep.subr.mxu0 0.0
    %798 = vmatpush1.xpose.msra.mxu0 0.0
    %799 = vmatprep.subr.mxu0 0.0
    %800 = vmatpush1.xpose.msra.mxu0 0.0
    %801 = vmatprep.subr.mxu0 0.0
    %802 = vmatpush1.xpose.msra.mxu0 0.0
    %803 = vmatprep.subr.mxu0 0.0
    %804 = vmatpush1.xpose.msra.mxu0 0.0
    %805 = vmatprep.subr.mxu0 0.0
    %806 = vmatpush1.xpose.msra.mxu0 0.0
    %807 = vmatprep.mubr.f32.mxu0 0.0
    %808 = vmatmul.mubr.f32.gmra.mrb[0].mxu0 %v738
    %v809 = vpop.f32.mrb[0].mxu0
    %v810 = vadd.f32 0.0, %v809
    %v811 = vpop.f32.mrb[0].mxu0
    %812 = vmatprep.mubr.f32.mxu0 0.0
    %813 = vmatmul.mubr.f32.gmra.mrb[0].mxu0 %v741
    %v814 = vpop.f32.mrb[0].mxu0
    %v815 = vadd.f32 0.0, %v814
    %v816 = vpop.f32.mrb[0].mxu0
    %817 = vdwg.mxu0
    %v819 = vsel %vm285, %v735, 0
    %v822 = vsel %vm285, %v736, 0
    %824 = vmatprep.subr.mxu0 0.0
    %825 = vmatpush1.xpose.msra.mxu0 %v383
    %826 = vmatprep.subr.mxu0 0.0
    %827 = vmatpush1.xpose.msra.mxu0 %v385
    %828 = vmatprep.subr.mxu0 0.0
    %829 = vmatpush1.xpose.msra.mxu0 0.0
    %830 = vmatprep.subr.mxu0 0.0
    %831 = vmatpush1.xpose.msra.mxu0 0.0
    %832 = vmatprep.subr.mxu0 0.0
    %833 = vmatpush1.xpose.msra.mxu0 0.0
    %834 = vmatprep.subr.mxu0 0.0
    %835 = vmatpush1.xpose.msra.mxu0 0.0
    %836 = vmatprep.subr.mxu0 0.0
    %837 = vmatpush1.xpose.msra.mxu0 0.0
    %838 = vmatprep.subr.mxu0 0.0
    %839 = vmatpush1.xpose.msra.mxu0 0.0
    %840 = vmatprep.subr.mxu0 0.0
    %841 = vmatpush1.xpose.msra.mxu0 0.0
    %842 = vmatprep.subr.mxu0 0.0
    %843 = vmatpush1.xpose.msra.mxu0 0.0
    %844 = vmatprep.subr.mxu0 0.0
    %845 = vmatpush1.xpose.msra.mxu0 0.0
    %846 = vmatprep.subr.mxu0 0.0
    %847 = vmatpush1.xpose.msra.mxu0 0.0
    %848 = vmatprep.subr.mxu0 0.0
    %849 = vmatpush1.xpose.msra.mxu0 0.0
    %850 = vmatprep.subr.mxu0 0.0
    %851 = vmatpush1.xpose.msra.mxu0 0.0
    %852 = vmatprep.subr.mxu0 0.0
    %853 = vmatpush1.xpose.msra.mxu0 0.0
    %854 = vmatprep.subr.mxu0 0.0
    %855 = vmatpush1.xpose.msra.mxu0 0.0
    %856 = vmatprep.subr.mxu0 0.0
    %857 = vmatpush1.xpose.msra.mxu0 0.0
    %858 = vmatprep.subr.mxu0 0.0
    %859 = vmatpush1.xpose.msra.mxu0 0.0
    %860 = vmatprep.subr.mxu0 0.0
    %861 = vmatpush1.xpose.msra.mxu0 0.0
    %862 = vmatprep.subr.mxu0 0.0
    %863 = vmatpush1.xpose.msra.mxu0 0.0
    %864 = vmatprep.subr.mxu0 0.0
    %865 = vmatpush1.xpose.msra.mxu0 0.0
    %866 = vmatprep.subr.mxu0 0.0
    %867 = vmatpush1.xpose.msra.mxu0 0.0
    %868 = vmatprep.subr.mxu0 0.0
    %869 = vmatpush1.xpose.msra.mxu0 0.0
    %870 = vmatprep.subr.mxu0 0.0
    %871 = vmatpush1.xpose.msra.mxu0 0.0
    %872 = vmatprep.subr.mxu0 0.0
    %873 = vmatpush1.xpose.msra.mxu0 0.0
    %874 = vmatprep.subr.mxu0 0.0
    %875 = vmatpush1.xpose.msra.mxu0 0.0
    %876 = vmatprep.subr.mxu0 0.0
    %877 = vmatpush1.xpose.msra.mxu0 0.0
    %878 = vmatprep.subr.mxu0 0.0
    %879 = vmatpush1.xpose.msra.mxu0 0.0
    %880 = vmatprep.subr.mxu0 0.0
    %881 = vmatpush1.xpose.msra.mxu0 0.0
    %882 = vmatprep.subr.mxu0 0.0
    %883 = vmatpush1.xpose.msra.mxu0 0.0
    %884 = vmatprep.subr.mxu0 0.0
    %885 = vmatpush1.xpose.msra.mxu0 0.0
    %886 = vmatprep.subr.mxu0 0.0
    %887 = vmatpush1.xpose.msra.mxu0 0.0
    %888 = vmatprep.mubr.f32.mxu0 0.0
    %889 = vmatmul.mubr.f32.gmra.mrb[0].mxu0 %v819
    %v890 = vpop.f32.mrb[0].mxu0
    %v891 = vadd.f32 0.0, %v890
    %v892 = vpop.f32.mrb[0].mxu0
    %893 = vmatprep.mubr.f32.mxu0 0.0
    %894 = vmatmul.mubr.f32.gmra.mrb[0].mxu0 %v822
    %v895 = vpop.f32.mrb[0].mxu0
    %v896 = vadd.f32 0.0, %v895
    %v897 = vpop.f32.mrb[0].mxu0
    %898 = vdwg.mxu0
    %v899 = vsub.f32 %v810, %v264
    %v900 = vsub.f32 %v815, %v264
    %v901 = vsub.f32 %v891, %v268
    %v902 = vsub.f32 %v896, %v268
    %v903 = vsel %vm466, %v899, -inf
    %904 = vmax.xlane.f32.xlu0 %v903
    %v905 = vpop.xlane.xlu0 %904
    %v906 = vsel %vm466, %v900, -inf
    %907 = vmax.xlane.f32.xlu0 %v906
    %v908 = vpop.xlane.xlu0 %907
    %v909 = vsel %vm466, %v901, -inf
    %910 = vmax.xlane.f32.xlu0 %v909
    %v911 = vpop.xlane.xlu0 %910
    %v912 = vsel %vm466, %v902, -inf
    %913 = vmax.xlane.f32.xlu0 %v912
    %v914 = vpop.xlane.xlu0 %913
    %v915 = vsub.f32 %v899, %v905
    %v916 = vsub.f32 %v900, %v908
    %v917 = vsub.f32 %v901, %v911
    %v918 = vsub.f32 %v902, %v914
    %v919 = vmul.f32 %v915, 1.442695
    %v920 = vpow.pop %v919
    %v921 = vmul.f32 %v916, 1.442695
    %v922 = vpow.pop %v921
    %v923 = vmul.f32 %v917, 1.442695
    %v924 = vpow.pop %v923
    %v925 = vmul.f32 %v918, 1.442695
    %v926 = vpow.pop %v925
    %v927 = vsel %vm466, %v920, 0.0
    %928 = vadd.xlane.f32.xlu0 %v927
    %v929 = vpop.xlane.xlu0 %928
    %v930 = vsel %vm466, %v922, 0.0
    %931 = vadd.xlane.f32.xlu0 %v930
    %v932 = vpop.xlane.xlu0 %931
    %v933 = vsel %vm466, %v924, 0.0
    %934 = vadd.xlane.f32.xlu0 %v933
    %v935 = vpop.xlane.xlu0 %934
    %v936 = vsel %vm466, %v926, 0.0
    %937 = vadd.xlane.f32.xlu0 %v936
    %v938 = vpop.xlane.xlu0 %937
    %v939 = vrcp.pop %v929
    %v940 = vrcp.pop %v932
    %v941 = vrcp.pop %v935
    %v942 = vrcp.pop %v938
    %v943 = vmul.f32 %v920, %v939
    %v944 = vmul.f32 %v922, %v940
    %v945 = vmul.f32 %v924, %v941
    %v946 = vmul.f32 %v926, %v942
    %v947 = vlaneseq
    %v948 = vshrl.u32 %v947, 7
    %v949 = vsub.s32 3, %v948
    %v950 = vrot.slane %v236, %v949
    %v951 = vmul.f32 %v214, %v950
    %v952 = vmul.f32 %v220, %v950
    %v953 = vmul.f32 %v226, %v950
    %v954 = vmul.f32 %v232, %v950
    %v956 = vsel %vm285, %v951, 0
    %v959 = vsel %vm285, %v952, 0
    %961 = vmatprep.subr.mxu0 0.0
    %962 = vmatpush1.xpose.msra.mxu0 %v292
    %963 = vmatprep.subr.mxu0 0.0
    %964 = vmatpush1.xpose.msra.mxu0 %v294
    %965 = vmatprep.subr.mxu0 0.0
    %966 = vmatpush1.xpose.msra.mxu0 0.0
    %967 = vmatprep.subr.mxu0 0.0
    %968 = vmatpush1.xpose.msra.mxu0 0.0
    %969 = vmatprep.subr.mxu0 0.0
    %970 = vmatpush1.xpose.msra.mxu0 0.0
    %971 = vmatprep.subr.mxu0 0.0
    %972 = vmatpush1.xpose.msra.mxu0 0.0
    %973 = vmatprep.subr.mxu0 0.0
    %974 = vmatpush1.xpose.msra.mxu0 0.0
    %975 = vmatprep.subr.mxu0 0.0
    %976 = vmatpush1.xpose.msra.mxu0 0.0
    %977 = vmatprep.subr.mxu0 0.0
    %978 = vmatpush1.xpose.msra.mxu0 0.0
    %979 = vmatprep.subr.mxu0 0.0
    %980 = vmatpush1.xpose.msra.mxu0 0.0
    %981 = vmatprep.subr.mxu0 0.0
    %982 = vmatpush1.xpose.msra.mxu0 0.0
    %983 = vmatprep.subr.mxu0 0.0
    %984 = vmatpush1.xpose.msra.mxu0 0.0
    %985 = vmatprep.subr.mxu0 0.0
    %986 = vmatpush1.xpose.msra.mxu0 0.0
    %987 = vmatprep.subr.mxu0 0.0
    %988 = vmatpush1.xpose.msra.mxu0 0.0
    %989 = vmatprep.subr.mxu0 0.0
    %990 = vmatpush1.xpose.msra.mxu0 0.0
    %991 = vmatprep.subr.mxu0 0.0
    %992 = vmatpush1.xpose.msra.mxu0 0.0
    %993 = vmatprep.subr.mxu0 0.0
    %994 = vmatpush1.xpose.msra.mxu0 0.0
    %995 = vmatprep.subr.mxu0 0.0
    %996 = vmatpush1.xpose.msra.mxu0 0.0
    %997 = vmatprep.subr.mxu0 0.0
    %998 = vmatpush1.xpose.msra.mxu0 0.0
    %999 = vmatprep.subr.mxu0 0.0
    %1000 = vmatpush1.xpose.msra.mxu0 0.0
    %1001 = vmatprep.subr.mxu0 0.0
    %1002 = vmatpush1.xpose.msra.mxu0 0.0
    %1003 = vmatprep.subr.mxu0 0.0
    %1004 = vmatpush1.xpose.msra.mxu0 0.0
    %1005 = vmatprep.subr.mxu0 0.0
    %1006 = vmatpush1.xpose.msra.mxu0 0.0
    %1007 = vmatprep.subr.mxu0 0.0
    %1008 = vmatpush1.xpose.msra.mxu0 0.0
    %1009 = vmatprep.subr.mxu0 0.0
    %1010 = vmatpush1.xpose.msra.mxu0 0.0
    %1011 = vmatprep.subr.mxu0 0.0
    %1012 = vmatpush1.xpose.msra.mxu0 0.0
    %1013 = vmatprep.subr.mxu0 0.0
    %1014 = vmatpush1.xpose.msra.mxu0 0.0
    %1015 = vmatprep.subr.mxu0 0.0
    %1016 = vmatpush1.xpose.msra.mxu0 0.0
    %1017 = vmatprep.subr.mxu0 0.0
    %1018 = vmatpush1.xpose.msra.mxu0 0.0
    %1019 = vmatprep.subr.mxu0 0.0
    %1020 = vmatpush1.xpose.msra.mxu0 0.0
    %1021 = vmatprep.subr.mxu0 0.0
    %1022 = vmatpush1.xpose.msra.mxu0 0.0
    %1023 = vmatprep.subr.mxu0 0.0
    %1024 = vmatpush1.xpose.msra.mxu0 0.0
    %1025 = vmatprep.mubr.f32.mxu0 0.0
    %1026 = vmatmul.mubr.f32.gmra.mrb[0].mxu0 %v956
    %v1027 = vpop.f32.mrb[0].mxu0
    %v1028 = vadd.f32 0.0, %v1027
    %v1029 = vpop.f32.mrb[0].mxu0
    %1030 = vmatprep.mubr.f32.mxu0 0.0
    %1031 = vmatmul.mubr.f32.gmra.mrb[0].mxu0 %v959
    %v1032 = vpop.f32.mrb[0].mxu0
    %v1033 = vadd.f32 0.0, %v1032
    %v1034 = vpop.f32.mrb[0].mxu0
    %1035 = vdwg.mxu0
    %v1037 = vsel %vm285, %v953, 0
    %v1040 = vsel %vm285, %v954, 0
    %1042 = vmatprep.subr.mxu0 0.0
    %1043 = vmatpush1.xpose.msra.mxu0 %v383
    %1044 = vmatprep.subr.mxu0 0.0
    %1045 = vmatpush1.xpose.msra.mxu0 %v385
    %1046 = vmatprep.subr.mxu0 0.0
    %1047 = vmatpush1.xpose.msra.mxu0 0.0
    %1048 = vmatprep.subr.mxu0 0.0
    %1049 = vmatpush1.xpose.msra.mxu0 0.0
    %1050 = vmatprep.subr.mxu0 0.0
    %1051 = vmatpush1.xpose.msra.mxu0 0.0
    %1052 = vmatprep.subr.mxu0 0.0
    %1053 = vmatpush1.xpose.msra.mxu0 0.0
    %1054 = vmatprep.subr.mxu0 0.0
    %1055 = vmatpush1.xpose.msra.mxu0 0.0
    %1056 = vmatprep.subr.mxu0 0.0
    %1057 = vmatpush1.xpose.msra.mxu0 0.0
    %1058 = vmatprep.subr.mxu0 0.0
    %1059 = vmatpush1.xpose.msra.mxu0 0.0
    %1060 = vmatprep.subr.mxu0 0.0
    %1061 = vmatpush1.xpose.msra.mxu0 0.0
    %1062 = vmatprep.subr.mxu0 0.0
    %1063 = vmatpush1.xpose.msra.mxu0 0.0
    %1064 = vmatprep.subr.mxu0 0.0
    %1065 = vmatpush1.xpose.msra.mxu0 0.0
    %1066 = vmatprep.subr.mxu0 0.0
    %1067 = vmatpush1.xpose.msra.mxu0 0.0
    %1068 = vmatprep.subr.mxu0 0.0
    %1069 = vmatpush1.xpose.msra.mxu0 0.0
    %1070 = vmatprep.subr.mxu0 0.0
    %1071 = vmatpush1.xpose.msra.mxu0 0.0
    %1072 = vmatprep.subr.mxu0 0.0
    %1073 = vmatpush1.xpose.msra.mxu0 0.0
    %1074 = vmatprep.subr.mxu0 0.0
    %1075 = vmatpush1.xpose.msra.mxu0 0.0
    %1076 = vmatprep.subr.mxu0 0.0
    %1077 = vmatpush1.xpose.msra.mxu0 0.0
    %1078 = vmatprep.subr.mxu0 0.0
    %1079 = vmatpush1.xpose.msra.mxu0 0.0
    %1080 = vmatprep.subr.mxu0 0.0
    %1081 = vmatpush1.xpose.msra.mxu0 0.0
    %1082 = vmatprep.subr.mxu0 0.0
    %1083 = vmatpush1.xpose.msra.mxu0 0.0
    %1084 = vmatprep.subr.mxu0 0.0
    %1085 = vmatpush1.xpose.msra.mxu0 0.0
    %1086 = vmatprep.subr.mxu0 0.0
    %1087 = vmatpush1.xpose.msra.mxu0 0.0
    %1088 = vmatprep.subr.mxu0 0.0
    %1089 = vmatpush1.xpose.msra.mxu0 0.0
    %1090 = vmatprep.subr.mxu0 0.0
    %1091 = vmatpush1.xpose.msra.mxu0 0.0
    %1092 = vmatprep.subr.mxu0 0.0
    %1093 = vmatpush1.xpose.msra.mxu0 0.0
    %1094 = vmatprep.subr.mxu0 0.0
    %1095 = vmatpush1.xpose.msra.mxu0 0.0
    %1096 = vmatprep.subr.mxu0 0.0
    %1097 = vmatpush1.xpose.msra.mxu0 0.0
    %1098 = vmatprep.subr.mxu0 0.0
    %1099 = vmatpush1.xpose.msra.mxu0 0.0
    %1100 = vmatprep.subr.mxu0 0.0
    %1101 = vmatpush1.xpose.msra.mxu0 0.0
    %1102 = vmatprep.subr.mxu0 0.0
    %1103 = vmatpush1.xpose.msra.mxu0 0.0
    %1104 = vmatprep.subr.mxu0 0.0
    %1105 = vmatpush1.xpose.msra.mxu0 0.0
    %1106 = vmatprep.mubr.f32.mxu0 0.0
    %1107 = vmatmul.mubr.f32.gmra.mrb[0].mxu0 %v1037
    %v1108 = vpop.f32.mrb[0].mxu0
    %v1109 = vadd.f32 0.0, %v1108
    %v1110 = vpop.f32.mrb[0].mxu0
    %1111 = vmatprep.mubr.f32.mxu0 0.0
    %1112 = vmatmul.mubr.f32.gmra.mrb[0].mxu0 %v1040
    %v1113 = vpop.f32.mrb[0].mxu0
    %v1114 = vadd.f32 0.0, %v1113
    %v1115 = vpop.f32.mrb[0].mxu0
    %1116 = vdwg.mxu0
    %v1117 = vsub.f32 %v1028, %v264
    %v1118 = vsub.f32 %v1033, %v264
    %v1119 = vsub.f32 %v1109, %v268
    %v1120 = vsub.f32 %v1114, %v268
    %v1121 = vsel %vm466, %v1117, -inf
    %1122 = vmax.xlane.f32.xlu0 %v1121
    %v1123 = vpop.xlane.xlu0 %1122
    %v1124 = vsel %vm466, %v1118, -inf
    %1125 = vmax.xlane.f32.xlu0 %v1124
    %v1126 = vpop.xlane.xlu0 %1125
    %v1127 = vsel %vm466, %v1119, -inf
    %1128 = vmax.xlane.f32.xlu0 %v1127
    %v1129 = vpop.xlane.xlu0 %1128
    %v1130 = vsel %vm466, %v1120, -inf
    %1131 = vmax.xlane.f32.xlu0 %v1130
    %v1132 = vpop.xlane.xlu0 %1131
    %v1133 = vsub.f32 %v1117, %v1123
    %v1134 = vsub.f32 %v1118, %v1126
    %v1135 = vsub.f32 %v1119, %v1129
    %v1136 = vsub.f32 %v1120, %v1132
    %v1137 = vmul.f32 %v1133, 1.442695
    %v1138 = vpow.pop %v1137
    %v1139 = vmul.f32 %v1134, 1.442695
    %v1140 = vpow.pop %v1139
    %v1141 = vmul.f32 %v1135, 1.442695
    %v1142 = vpow.pop %v1141
    %v1143 = vmul.f32 %v1136, 1.442695
    %v1144 = vpow.pop %v1143
    %v1145 = vsel %vm466, %v1138, 0.0
    %1146 = vadd.xlane.f32.xlu0 %v1145
    %v1147 = vpop.xlane.xlu0 %1146
    %v1148 = vsel %vm466, %v1140, 0.0
    %1149 = vadd.xlane.f32.xlu0 %v1148
    %v1150 = vpop.xlane.xlu0 %1149
    %v1151 = vsel %vm466, %v1142, 0.0
    %1152 = vadd.xlane.f32.xlu0 %v1151
    %v1153 = vpop.xlane.xlu0 %1152
    %v1154 = vsel %vm466, %v1144, 0.0
    %1155 = vadd.xlane.f32.xlu0 %v1154
    %v1156 = vpop.xlane.xlu0 %1155
    %v1157 = vrcp.pop %v1147
    %v1158 = vrcp.pop %v1150
    %v1159 = vrcp.pop %v1153
    %v1160 = vrcp.pop %v1156
    %v1161 = vmul.f32 %v1138, %v1157
    %v1162 = vmul.f32 %v1140, %v1158
    %v1163 = vmul.f32 %v1142, %v1159
    %v1164 = vmul.f32 %v1144, %v1160
    %s1165 = sld [smem:[#allocation8]]
    %v1166 = vstv %s1165
    %v1167 = vmul.f32 %v1166, %v507
    %v1168 = vmul.f32 %v1166, %v508
    %v1169 = vmul.f32 %v1166, %v509
    %v1170 = vmul.f32 %v1166, %v510
    %s1171 = sld [smem:[#allocation8 + $0x4]]
    %v1172 = vstv %s1171
    %v1173 = vmul.f32 %v1172, %v725
    %v1174 = vmul.f32 %v1172, %v726
    %v1175 = vmul.f32 %v1172, %v727
    %v1176 = vmul.f32 %v1172, %v728
    %v1177 = vadd.f32 %v1167, %v1173
    %v1178 = vadd.f32 %v1168, %v1174
    %v1179 = vadd.f32 %v1169, %v1175
    %v1180 = vadd.f32 %v1170, %v1176
    %s1181 = sld [smem:[#allocation8 + $0x8]]
    %v1182 = vstv %s1181
    %v1183 = vmul.f32 %v1182, %v943
    %v1184 = vmul.f32 %v1182, %v944
    %v1185 = vmul.f32 %v1182, %v945
    %v1186 = vmul.f32 %v1182, %v946
    %v1187 = vadd.f32 %v1177, %v1183
    %v1188 = vadd.f32 %v1178, %v1184
    %v1189 = vadd.f32 %v1179, %v1185
    %v1190 = vadd.f32 %v1180, %v1186
    %s1191 = sld [smem:[#allocation8 + $0xc]]
    %v1192 = vstv %s1191
    %v1193 = vmul.f32 %v1192, %v1161
    %v1194 = vmul.f32 %v1192, %v1162
    %v1195 = vmul.f32 %v1192, %v1163
    %v1196 = vmul.f32 %v1192, %v1164
    %v1197 = vadd.f32 %v1187, %v1193
    %v1198 = vadd.f32 %v1188, %v1194
    %v1199 = vadd.f32 %v1189, %v1195
    %v1200 = vadd.f32 %v1190, %v1196
    %v1202 = vsel %vm466, %v1197, 0
    %v1205 = vsel %vm466, %v1198, 0
    %1207 = vmatprep.subr.mxu0 0.0
    %1208 = vmatpush1.msra.mxu0 %v216
    %1209 = vmatprep.subr.mxu0 0.0
    %1210 = vmatpush1.msra.mxu0 %v222
    %1211 = vmatprep.subr.mxu0 0.0
    %1212 = vmatpush1.msra.mxu0 0.0
    %1213 = vmatprep.subr.mxu0 0.0
    %1214 = vmatpush1.msra.mxu0 0.0
    %1215 = vmatprep.subr.mxu0 0.0
    %1216 = vmatpush1.msra.mxu0 0.0
    %1217 = vmatprep.subr.mxu0 0.0
    %1218 = vmatpush1.msra.mxu0 0.0
    %1219 = vmatprep.subr.mxu0 0.0
    %1220 = vmatpush1.msra.mxu0 0.0
    %1221 = vmatprep.subr.mxu0 0.0
    %1222 = vmatpush1.msra.mxu0 0.0
    %1223 = vmatprep.subr.mxu0 0.0
    %1224 = vmatpush1.msra.mxu0 0.0
    %1225 = vmatprep.subr.mxu0 0.0
    %1226 = vmatpush1.msra.mxu0 0.0
    %1227 = vmatprep.subr.mxu0 0.0
    %1228 = vmatpush1.msra.mxu0 0.0
    %1229 = vmatprep.subr.mxu0 0.0
    %1230 = vmatpush1.msra.mxu0 0.0
    %1231 = vmatprep.subr.mxu0 0.0
    %1232 = vmatpush1.msra.mxu0 0.0
    %1233 = vmatprep.subr.mxu0 0.0
    %1234 = vmatpush1.msra.mxu0 0.0
    %1235 = vmatprep.subr.mxu0 0.0
    %1236 = vmatpush1.msra.mxu0 0.0
    %1237 = vmatprep.subr.mxu0 0.0
    %1238 = vmatpush1.msra.mxu0 0.0
    %1239 = vmatprep.subr.mxu0 0.0
    %1240 = vmatpush1.msra.mxu0 0.0
    %1241 = vmatprep.subr.mxu0 0.0
    %1242 = vmatpush1.msra.mxu0 0.0
    %1243 = vmatprep.subr.mxu0 0.0
    %1244 = vmatpush1.msra.mxu0 0.0
    %1245 = vmatprep.subr.mxu0 0.0
    %1246 = vmatpush1.msra.mxu0 0.0
    %1247 = vmatprep.subr.mxu0 0.0
    %1248 = vmatpush1.msra.mxu0 0.0
    %1249 = vmatprep.subr.mxu0 0.0
    %1250 = vmatpush1.msra.mxu0 0.0
    %1251 = vmatprep.subr.mxu0 0.0
    %1252 = vmatpush1.msra.mxu0 0.0
    %1253 = vmatprep.subr.mxu0 0.0
    %1254 = vmatpush1.msra.mxu0 0.0
    %1255 = vmatprep.subr.mxu0 0.0
    %1256 = vmatpush1.msra.mxu0 0.0
    %1257 = vmatprep.subr.mxu0 0.0
    %1258 = vmatpush1.msra.mxu0 0.0
    %1259 = vmatprep.subr.mxu0 0.0
    %1260 = vmatpush1.msra.mxu0 0.0
    %1261 = vmatprep.subr.mxu0 0.0
    %1262 = vmatpush1.msra.mxu0 0.0
    %1263 = vmatprep.subr.mxu0 0.0
    %1264 = vmatpush1.msra.mxu0 0.0
    %1265 = vmatprep.subr.mxu0 0.0
    %1266 = vmatpush1.msra.mxu0 0.0
    %1267 = vmatprep.subr.mxu0 0.0
    %1268 = vmatpush1.msra.mxu0 0.0
    %1269 = vmatprep.subr.mxu0 0.0
    %1270 = vmatpush1.msra.mxu0 0.0
    %1271 = vmatprep.mubr.f32.mxu0 0.0
    %1272 = vmatmul.mubr.f32.gmra.mrb[0].mxu0 %v1202
    %v1273 = vpop.f32.mrb[0].mxu0
    %v1274 = vadd.f32 0.0, %v1273
    %v1275 = vpop.f32.mrb[0].mxu0
    %1276 = vmatprep.mubr.f32.mxu0 0.0
    %1277 = vmatmul.mubr.f32.gmra.mrb[0].mxu0 %v1205
    %v1278 = vpop.f32.mrb[0].mxu0
    %v1279 = vadd.f32 0.0, %v1278
    %v1280 = vpop.f32.mrb[0].mxu0
    %1281 = vdwg.mxu0
    %v1283 = vsel %vm466, %v1199, 0
    %v1286 = vsel %vm466, %v1200, 0
    %1288 = vmatprep.subr.mxu0 0.0
    %1289 = vmatpush1.msra.mxu0 %v228
    %1290 = vmatprep.subr.mxu0 0.0
    %1291 = vmatpush1.msra.mxu0 %v234
    %1292 = vmatprep.subr.mxu0 0.0
    %1293 = vmatpush1.msra.mxu0 0.0
    %1294 = vmatprep.subr.mxu0 0.0
    %1295 = vmatpush1.msra.mxu0 0.0
    %1296 = vmatprep.subr.mxu0 0.0
    %1297 = vmatpush1.msra.mxu0 0.0
    %1298 = vmatprep.subr.mxu0 0.0
    %1299 = vmatpush1.msra.mxu0 0.0
    %1300 = vmatprep.subr.mxu0 0.0
    %1301 = vmatpush1.msra.mxu0 0.0
    %1302 = vmatprep.subr.mxu0 0.0
    %1303 = vmatpush1.msra.mxu0 0.0
    %1304 = vmatprep.subr.mxu0 0.0
    %1305 = vmatpush1.msra.mxu0 0.0
    %1306 = vmatprep.subr.mxu0 0.0
    %1307 = vmatpush1.msra.mxu0 0.0
    %1308 = vmatprep.subr.mxu0 0.0
    %1309 = vmatpush1.msra.mxu0 0.0
    %1310 = vmatprep.subr.mxu0 0.0
    %1311 = vmatpush1.msra.mxu0 0.0
    %1312 = vmatprep.subr.mxu0 0.0
    %1313 = vmatpush1.msra.mxu0 0.0
    %1314 = vmatprep.subr.mxu0 0.0
    %1315 = vmatpush1.msra.mxu0 0.0
    %1316 = vmatprep.subr.mxu0 0.0
    %1317 = vmatpush1.msra.mxu0 0.0
    %1318 = vmatprep.subr.mxu0 0.0
    %1319 = vmatpush1.msra.mxu0 0.0
    %1320 = vmatprep.subr.mxu0 0.0
    %1321 = vmatpush1.msra.mxu0 0.0
    %1322 = vmatprep.subr.mxu0 0.0
    %1323 = vmatpush1.msra.mxu0 0.0
    %1324 = vmatprep.subr.mxu0 0.0
    %1325 = vmatpush1.msra.mxu0 0.0
    %1326 = vmatprep.subr.mxu0 0.0
    %1327 = vmatpush1.msra.mxu0 0.0
    %1328 = vmatprep.subr.mxu0 0.0
    %1329 = vmatpush1.msra.mxu0 0.0
    %1330 = vmatprep.subr.mxu0 0.0
    %1331 = vmatpush1.msra.mxu0 0.0
    %1332 = vmatprep.subr.mxu0 0.0
    %1333 = vmatpush1.msra.mxu0 0.0
    %1334 = vmatprep.subr.mxu0 0.0
    %1335 = vmatpush1.msra.mxu0 0.0
    %1336 = vmatprep.subr.mxu0 0.0
    %1337 = vmatpush1.msra.mxu0 0.0
    %1338 = vmatprep.subr.mxu0 0.0
    %1339 = vmatpush1.msra.mxu0 0.0
    %1340 = vmatprep.subr.mxu0 0.0
    %1341 = vmatpush1.msra.mxu0 0.0
    %1342 = vmatprep.subr.mxu0 0.0
    %1343 = vmatpush1.msra.mxu0 0.0
    %1344 = vmatprep.subr.mxu0 0.0
    %1345 = vmatpush1.msra.mxu0 0.0
    %1346 = vmatprep.subr.mxu0 0.0
    %1347 = vmatpush1.msra.mxu0 0.0
    %1348 = vmatprep.subr.mxu0 0.0
    %1349 = vmatpush1.msra.mxu0 0.0
    %1350 = vmatprep.subr.mxu0 0.0
    %1351 = vmatpush1.msra.mxu0 0.0
    %1352 = vmatprep.mubr.f32.mxu0 0.0
    %1353 = vmatmul.mubr.f32.gmra.mrb[0].mxu0 %v1283
    %v1354 = vpop.f32.mrb[0].mxu0
    %v1355 = vadd.f32 0.0, %v1354
    %v1356 = vpop.f32.mrb[0].mxu0
    %1357 = vmatprep.mubr.f32.mxu0 0.0
    %1358 = vmatmul.mubr.f32.gmra.mrb[0].mxu0 %v1286
    %v1359 = vpop.f32.mrb[0].mxu0
    %v1360 = vadd.f32 0.0, %v1359
    %v1361 = vpop.f32.mrb[0].mxu0
    %1362 = vdwg.mxu0
    %s1363 = sld [smem:[#allocation8 + $0x1]]
    %v1364 = vstv %s1363
    %v1365 = vmul.f32 %v1364, %v507
    %v1366 = vmul.f32 %v1364, %v508
    %v1367 = vmul.f32 %v1364, %v509
    %v1368 = vmul.f32 %v1364, %v510
    %s1369 = sld [smem:[#allocation8 + $0x5]]
    %v1370 = vstv %s1369
    %v1371 = vmul.f32 %v1370, %v725
    %v1372 = vmul.f32 %v1370, %v726
    %v1373 = vmul.f32 %v1370, %v727
    %v1374 = vmul.f32 %v1370, %v728
    %v1375 = vadd.f32 %v1365, %v1371
    %v1376 = vadd.f32 %v1366, %v1372
    %v1377 = vadd.f32 %v1367, %v1373
    %v1378 = vadd.f32 %v1368, %v1374
    %s1379 = sld [smem:[#allocation8 + $0x9]]
    %v1380 = vstv %s1379
    %v1381 = vmul.f32 %v1380, %v943
    %v1382 = vmul.f32 %v1380, %v944
    %v1383 = vmul.f32 %v1380, %v945
    %v1384 = vmul.f32 %v1380, %v946
    %v1385 = vadd.f32 %v1375, %v1381
    %v1386 = vadd.f32 %v1376, %v1382
    %v1387 = vadd.f32 %v1377, %v1383
    %v1388 = vadd.f32 %v1378, %v1384
    %s1389 = sld [smem:[#allocation8 + $0xd]]
    %v1390 = vstv %s1389
    %v1391 = vmul.f32 %v1390, %v1161
    %v1392 = vmul.f32 %v1390, %v1162
    %v1393 = vmul.f32 %v1390, %v1163
    %v1394 = vmul.f32 %v1390, %v1164
    %v1395 = vadd.f32 %v1385, %v1391
    %v1396 = vadd.f32 %v1386, %v1392
    %v1397 = vadd.f32 %v1387, %v1393
    %v1398 = vadd.f32 %v1388, %v1394
    %1401 = vrot.lane.b32.xlu0 %v216, 112
    %v1402 = vpop.permute.xlu0 %1401
    %1403 = vrot.lane.b32.xlu0 %v222, 112
    %v1404 = vpop.permute.xlu0 %1403
    %v1408 = vsel %vm466, %v1395, 0
    %v1411 = vsel %vm466, %v1396, 0
    %1413 = vmatprep.subr.mxu0 0.0
    %1414 = vmatpush1.msra.mxu0 %v1402
    %1415 = vmatprep.subr.mxu0 0.0
    %1416 = vmatpush1.msra.mxu0 %v1404
    %1417 = vmatprep.subr.mxu0 0.0
    %1418 = vmatpush1.msra.mxu0 0.0
    %1419 = vmatprep.subr.mxu0 0.0
    %1420 = vmatpush1.msra.mxu0 0.0
    %1421 = vmatprep.subr.mxu0 0.0
    %1422 = vmatpush1.msra.mxu0 0.0
    %1423 = vmatprep.subr.mxu0 0.0
    %1424 = vmatpush1.msra.mxu0 0.0
    %1425 = vmatprep.subr.mxu0 0.0
    %1426 = vmatpush1.msra.mxu0 0.0
    %1427 = vmatprep.subr.mxu0 0.0
    %1428 = vmatpush1.msra.mxu0 0.0
    %1429 = vmatprep.subr.mxu0 0.0
    %1430 = vmatpush1.msra.mxu0 0.0
    %1431 = vmatprep.subr.mxu0 0.0
    %1432 = vmatpush1.msra.mxu0 0.0
    %1433 = vmatprep.subr.mxu0 0.0
    %1434 = vmatpush1.msra.mxu0 0.0
    %1435 = vmatprep.subr.mxu0 0.0
    %1436 = vmatpush1.msra.mxu0 0.0
    %1437 = vmatprep.subr.mxu0 0.0
    %1438 = vmatpush1.msra.mxu0 0.0
    %1439 = vmatprep.subr.mxu0 0.0
    %1440 = vmatpush1.msra.mxu0 0.0
    %1441 = vmatprep.subr.mxu0 0.0
    %1442 = vmatpush1.msra.mxu0 0.0
    %1443 = vmatprep.subr.mxu0 0.0
    %1444 = vmatpush1.msra.mxu0 0.0
    %1445 = vmatprep.subr.mxu0 0.0
    %1446 = vmatpush1.msra.mxu0 0.0
    %1447 = vmatprep.subr.mxu0 0.0
    %1448 = vmatpush1.msra.mxu0 0.0
    %1449 = vmatprep.subr.mxu0 0.0
    %1450 = vmatpush1.msra.mxu0 0.0
    %1451 = vmatprep.subr.mxu0 0.0
    %1452 = vmatpush1.msra.mxu0 0.0
    %1453 = vmatprep.subr.mxu0 0.0
    %1454 = vmatpush1.msra.mxu0 0.0
    %1455 = vmatprep.subr.mxu0 0.0
    %1456 = vmatpush1.msra.mxu0 0.0
    %1457 = vmatprep.subr.mxu0 0.0
    %1458 = vmatpush1.msra.mxu0 0.0
    %1459 = vmatprep.subr.mxu0 0.0
    %1460 = vmatpush1.msra.mxu0 0.0
    %1461 = vmatprep.subr.mxu0 0.0
    %1462 = vmatpush1.msra.mxu0 0.0
    %1463 = vmatprep.subr.mxu0 0.0
    %1464 = vmatpush1.msra.mxu0 0.0
    %1465 = vmatprep.subr.mxu0 0.0
    %1466 = vmatpush1.msra.mxu0 0.0
    %1467 = vmatprep.subr.mxu0 0.0
    %1468 = vmatpush1.msra.mxu0 0.0
    %1469 = vmatprep.subr.mxu0 0.0
    %1470 = vmatpush1.msra.mxu0 0.0
    %1471 = vmatprep.subr.mxu0 0.0
    %1472 = vmatpush1.msra.mxu0 0.0
    %1473 = vmatprep.subr.mxu0 0.0
    %1474 = vmatpush1.msra.mxu0 0.0
    %1475 = vmatprep.subr.mxu0 0.0
    %1476 = vmatpush1.msra.mxu0 0.0
    %1477 = vmatprep.mubr.f32.mxu0 0.0
    %1478 = vmatmul.mubr.f32.gmra.mrb[0].mxu0 %v1408
    %v1479 = vpop.f32.mrb[0].mxu0
    %v1480 = vadd.f32 0.0, %v1479
    %v1481 = vpop.f32.mrb[0].mxu0
    %1482 = vmatprep.mubr.f32.mxu0 0.0
    %1483 = vmatmul.mubr.f32.gmra.mrb[0].mxu0 %v1411
    %v1484 = vpop.f32.mrb[0].mxu0
    %v1485 = vadd.f32 0.0, %v1484
    %v1486 = vpop.f32.mrb[0].mxu0
    %1487 = vdwg.mxu0
    %1490 = vrot.lane.b32.xlu0 %v228, 112
    %v1491 = vpop.permute.xlu0 %1490
    %1492 = vrot.lane.b32.xlu0 %v234, 112
    %v1493 = vpop.permute.xlu0 %1492
    %v1497 = vsel %vm466, %v1397, 0
    %v1500 = vsel %vm466, %v1398, 0
    %1502 = vmatprep.subr.mxu0 0.0
    %1503 = vmatpush1.msra.mxu0 %v1491
    %1504 = vmatprep.subr.mxu0 0.0
    %1505 = vmatpush1.msra.mxu0 %v1493
    %1506 = vmatprep.subr.mxu0 0.0
    %1507 = vmatpush1.msra.mxu0 0.0
    %1508 = vmatprep.subr.mxu0 0.0
    %1509 = vmatpush1.msra.mxu0 0.0
    %1510 = vmatprep.subr.mxu0 0.0
    %1511 = vmatpush1.msra.mxu0 0.0
    %1512 = vmatprep.subr.mxu0 0.0
    %1513 = vmatpush1.msra.mxu0 0.0
    %1514 = vmatprep.subr.mxu0 0.0
    %1515 = vmatpush1.msra.mxu0 0.0
    %1516 = vmatprep.subr.mxu0 0.0
    %1517 = vmatpush1.msra.mxu0 0.0
    %1518 = vmatprep.subr.mxu0 0.0
    %1519 = vmatpush1.msra.mxu0 0.0
    %1520 = vmatprep.subr.mxu0 0.0
    %1521 = vmatpush1.msra.mxu0 0.0
    %1522 = vmatprep.subr.mxu0 0.0
    %1523 = vmatpush1.msra.mxu0 0.0
    %1524 = vmatprep.subr.mxu0 0.0
    %1525 = vmatpush1.msra.mxu0 0.0
    %1526 = vmatprep.subr.mxu0 0.0
    %1527 = vmatpush1.msra.mxu0 0.0
    %1528 = vmatprep.subr.mxu0 0.0
    %1529 = vmatpush1.msra.mxu0 0.0
    %1530 = vmatprep.subr.mxu0 0.0
    %1531 = vmatpush1.msra.mxu0 0.0
    %1532 = vmatprep.subr.mxu0 0.0
    %1533 = vmatpush1.msra.mxu0 0.0
    %1534 = vmatprep.subr.mxu0 0.0
    %1535 = vmatpush1.msra.mxu0 0.0
    %1536 = vmatprep.subr.mxu0 0.0
    %1537 = vmatpush1.msra.mxu0 0.0
    %1538 = vmatprep.subr.mxu0 0.0
    %1539 = vmatpush1.msra.mxu0 0.0
    %1540 = vmatprep.subr.mxu0 0.0
    %1541 = vmatpush1.msra.mxu0 0.0
    %1542 = vmatprep.subr.mxu0 0.0
    %1543 = vmatpush1.msra.mxu0 0.0
    %1544 = vmatprep.subr.mxu0 0.0
    %1545 = vmatpush1.msra.mxu0 0.0
    %1546 = vmatprep.subr.mxu0 0.0
    %1547 = vmatpush1.msra.mxu0 0.0
    %1548 = vmatprep.subr.mxu0 0.0
    %1549 = vmatpush1.msra.mxu0 0.0
    %1550 = vmatprep.subr.mxu0 0.0
    %1551 = vmatpush1.msra.mxu0 0.0
    %1552 = vmatprep.subr.mxu0 0.0
    %1553 = vmatpush1.msra.mxu0 0.0
    %1554 = vmatprep.subr.mxu0 0.0
    %1555 = vmatpush1.msra.mxu0 0.0
    %1556 = vmatprep.subr.mxu0 0.0
    %1557 = vmatpush1.msra.mxu0 0.0
    %1558 = vmatprep.subr.mxu0 0.0
    %1559 = vmatpush1.msra.mxu0 0.0
    %1560 = vmatprep.subr.mxu0 0.0
    %1561 = vmatpush1.msra.mxu0 0.0
    %1562 = vmatprep.subr.mxu0 0.0
    %1563 = vmatpush1.msra.mxu0 0.0
    %1564 = vmatprep.subr.mxu0 0.0
    %1565 = vmatpush1.msra.mxu0 0.0
    %1566 = vmatprep.mubr.f32.mxu0 0.0
    %1567 = vmatmul.mubr.f32.gmra.mrb[0].mxu0 %v1497
    %v1568 = vpop.f32.mrb[0].mxu0
    %v1569 = vadd.f32 0.0, %v1568
    %v1570 = vpop.f32.mrb[0].mxu0
    %1571 = vmatprep.mubr.f32.mxu0 0.0
    %1572 = vmatmul.mubr.f32.gmra.mrb[0].mxu0 %v1500
    %v1573 = vpop.f32.mrb[0].mxu0
    %v1574 = vadd.f32 0.0, %v1573
    %v1575 = vpop.f32.mrb[0].mxu0
    %1576 = vdwg.mxu0
    %s1577 = sld [smem:[#allocation8 + $0x2]]
    %v1578 = vstv %s1577
    %v1579 = vmul.f32 %v1578, %v507
    %v1580 = vmul.f32 %v1578, %v508
    %v1581 = vmul.f32 %v1578, %v509
    %v1582 = vmul.f32 %v1578, %v510
    %s1583 = sld [smem:[#allocation8 + $0x6]]
    %v1584 = vstv %s1583
    %v1585 = vmul.f32 %v1584, %v725
    %v1586 = vmul.f32 %v1584, %v726
    %v1587 = vmul.f32 %v1584, %v727
    %v1588 = vmul.f32 %v1584, %v728
    %v1589 = vadd.f32 %v1579, %v1585
    %v1590 = vadd.f32 %v1580, %v1586
    %v1591 = vadd.f32 %v1581, %v1587
    %v1592 = vadd.f32 %v1582, %v1588
    %s1593 = sld [smem:[#allocation8 + $0xa]]
    %v1594 = vstv %s1593
    %v1595 = vmul.f32 %v1594, %v943
    %v1596 = vmul.f32 %v1594, %v944
    %v1597 = vmul.f32 %v1594, %v945
    %v1598 = vmul.f32 %v1594, %v946
    %v1599 = vadd.f32 %v1589, %v1595
    %v1600 = vadd.f32 %v1590, %v1596
    %v1601 = vadd.f32 %v1591, %v1597
    %v1602 = vadd.f32 %v1592, %v1598
    %s1603 = sld [smem:[#allocation8 + $0xe]]
    %v1604 = vstv %s1603
    %v1605 = vmul.f32 %v1604, %v1161
    %v1606 = vmul.f32 %v1604, %v1162
    %v1607 = vmul.f32 %v1604, %v1163
    %v1608 = vmul.f32 %v1604, %v1164
    %v1609 = vadd.f32 %v1599, %v1605
    %v1610 = vadd.f32 %v1600, %v1606
    %v1611 = vadd.f32 %v1601, %v1607
    %v1612 = vadd.f32 %v1602, %v1608
    %1613 = vrot.lane.b32.xlu0 %v216, 96
    %v1614 = vpop.permute.xlu0 %1613
    %1615 = vrot.lane.b32.xlu0 %v222, 96
    %v1616 = vpop.permute.xlu0 %1615
    %v1620 = vsel %vm466, %v1609, 0
    %v1623 = vsel %vm466, %v1610, 0
    %1625 = vmatprep.subr.mxu0 0.0
    %1626 = vmatpush1.msra.mxu0 %v1614
    %1627 = vmatprep.subr.mxu0 0.0
    %1628 = vmatpush1.msra.mxu0 %v1616
    %1629 = vmatprep.subr.mxu0 0.0
    %1630 = vmatpush1.msra.mxu0 0.0
    %1631 = vmatprep.subr.mxu0 0.0
    %1632 = vmatpush1.msra.mxu0 0.0
    %1633 = vmatprep.subr.mxu0 0.0
    %1634 = vmatpush1.msra.mxu0 0.0
    %1635 = vmatprep.subr.mxu0 0.0
    %1636 = vmatpush1.msra.mxu0 0.0
    %1637 = vmatprep.subr.mxu0 0.0
    %1638 = vmatpush1.msra.mxu0 0.0
    %1639 = vmatprep.subr.mxu0 0.0
    %1640 = vmatpush1.msra.mxu0 0.0
    %1641 = vmatprep.subr.mxu0 0.0
    %1642 = vmatpush1.msra.mxu0 0.0
    %1643 = vmatprep.subr.mxu0 0.0
    %1644 = vmatpush1.msra.mxu0 0.0
    %1645 = vmatprep.subr.mxu0 0.0
    %1646 = vmatpush1.msra.mxu0 0.0
    %1647 = vmatprep.subr.mxu0 0.0
    %1648 = vmatpush1.msra.mxu0 0.0
    %1649 = vmatprep.subr.mxu0 0.0
    %1650 = vmatpush1.msra.mxu0 0.0
    %1651 = vmatprep.subr.mxu0 0.0
    %1652 = vmatpush1.msra.mxu0 0.0
    %1653 = vmatprep.subr.mxu0 0.0
    %1654 = vmatpush1.msra.mxu0 0.0
    %1655 = vmatprep.subr.mxu0 0.0
    %1656 = vmatpush1.msra.mxu0 0.0
    %1657 = vmatprep.subr.mxu0 0.0
    %1658 = vmatpush1.msra.mxu0 0.0
    %1659 = vmatprep.subr.mxu0 0.0
    %1660 = vmatpush1.msra.mxu0 0.0
    %1661 = vmatprep.subr.mxu0 0.0
    %1662 = vmatpush1.msra.mxu0 0.0
    %1663 = vmatprep.subr.mxu0 0.0
    %1664 = vmatpush1.msra.mxu0 0.0
    %1665 = vmatprep.subr.mxu0 0.0
    %1666 = vmatpush1.msra.mxu0 0.0
    %1667 = vmatprep.subr.mxu0 0.0
    %1668 = vmatpush1.msra.mxu0 0.0
    %1669 = vmatprep.subr.mxu0 0.0
    %1670 = vmatpush1.msra.mxu0 0.0
    %1671 = vmatprep.subr.mxu0 0.0
    %1672 = vmatpush1.msra.mxu0 0.0
    %1673 = vmatprep.subr.mxu0 0.0
    %1674 = vmatpush1.msra.mxu0 0.0
    %1675 = vmatprep.subr.mxu0 0.0
    %1676 = vmatpush1.msra.mxu0 0.0
    %1677 = vmatprep.subr.mxu0 0.0
    %1678 = vmatpush1.msra.mxu0 0.0
    %1679 = vmatprep.subr.mxu0 0.0
    %1680 = vmatpush1.msra.mxu0 0.0
    %1681 = vmatprep.subr.mxu0 0.0
    %1682 = vmatpush1.msra.mxu0 0.0
    %1683 = vmatprep.subr.mxu0 0.0
    %1684 = vmatpush1.msra.mxu0 0.0
    %1685 = vmatprep.subr.mxu0 0.0
    %1686 = vmatpush1.msra.mxu0 0.0
    %1687 = vmatprep.subr.mxu0 0.0
    %1688 = vmatpush1.msra.mxu0 0.0
    %1689 = vmatprep.mubr.f32.mxu0 0.0
    %1690 = vmatmul.mubr.f32.gmra.mrb[0].mxu0 %v1620
    %v1691 = vpop.f32.mrb[0].mxu0
    %v1692 = vadd.f32 0.0, %v1691
    %v1693 = vpop.f32.mrb[0].mxu0
    %1694 = vmatprep.mubr.f32.mxu0 0.0
    %1695 = vmatmul.mubr.f32.gmra.mrb[0].mxu0 %v1623
    %v1696 = vpop.f32.mrb[0].mxu0
    %v1697 = vadd.f32 0.0, %v1696
    %v1698 = vpop.f32.mrb[0].mxu0
    %1699 = vdwg.mxu0
    %1700 = vrot.lane.b32.xlu0 %v228, 96
    %v1701 = vpop.permute.xlu0 %1700
    %1702 = vrot.lane.b32.xlu0 %v234, 96
    %v1703 = vpop.permute.xlu0 %1702
    %v1707 = vsel %vm466, %v1611, 0
    %v1710 = vsel %vm466, %v1612, 0
    %1712 = vmatprep.subr.mxu0 0.0
    %1713 = vmatpush1.msra.mxu0 %v1701
    %1714 = vmatprep.subr.mxu0 0.0
    %1715 = vmatpush1.msra.mxu0 %v1703
    %1716 = vmatprep.subr.mxu0 0.0
    %1717 = vmatpush1.msra.mxu0 0.0
    %1718 = vmatprep.subr.mxu0 0.0
    %1719 = vmatpush1.msra.mxu0 0.0
    %1720 = vmatprep.subr.mxu0 0.0
    %1721 = vmatpush1.msra.mxu0 0.0
    %1722 = vmatprep.subr.mxu0 0.0
    %1723 = vmatpush1.msra.mxu0 0.0
    %1724 = vmatprep.subr.mxu0 0.0
    %1725 = vmatpush1.msra.mxu0 0.0
    %1726 = vmatprep.subr.mxu0 0.0
    %1727 = vmatpush1.msra.mxu0 0.0
    %1728 = vmatprep.subr.mxu0 0.0
    %1729 = vmatpush1.msra.mxu0 0.0
    %1730 = vmatprep.subr.mxu0 0.0
    %1731 = vmatpush1.msra.mxu0 0.0
    %1732 = vmatprep.subr.mxu0 0.0
    %1733 = vmatpush1.msra.mxu0 0.0
    %1734 = vmatprep.subr.mxu0 0.0
    %1735 = vmatpush1.msra.mxu0 0.0
    %1736 = vmatprep.subr.mxu0 0.0
    %1737 = vmatpush1.msra.mxu0 0.0
    %1738 = vmatprep.subr.mxu0 0.0
    %1739 = vmatpush1.msra.mxu0 0.0
    %1740 = vmatprep.subr.mxu0 0.0
    %1741 = vmatpush1.msra.mxu0 0.0
    %1742 = vmatprep.subr.mxu0 0.0
    %1743 = vmatpush1.msra.mxu0 0.0
    %1744 = vmatprep.subr.mxu0 0.0
    %1745 = vmatpush1.msra.mxu0 0.0
    %1746 = vmatprep.subr.mxu0 0.0
    %1747 = vmatpush1.msra.mxu0 0.0
    %1748 = vmatprep.subr.mxu0 0.0
    %1749 = vmatpush1.msra.mxu0 0.0
    %1750 = vmatprep.subr.mxu0 0.0
    %1751 = vmatpush1.msra.mxu0 0.0
    %1752 = vmatprep.subr.mxu0 0.0
    %1753 = vmatpush1.msra.mxu0 0.0
    %1754 = vmatprep.subr.mxu0 0.0
    %1755 = vmatpush1.msra.mxu0 0.0
    %1756 = vmatprep.subr.mxu0 0.0
    %1757 = vmatpush1.msra.mxu0 0.0
    %1758 = vmatprep.subr.mxu0 0.0
    %1759 = vmatpush1.msra.mxu0 0.0
    %1760 = vmatprep.subr.mxu0 0.0
    %1761 = vmatpush1.msra.mxu0 0.0
    %1762 = vmatprep.subr.mxu0 0.0
    %1763 = vmatpush1.msra.mxu0 0.0
    %1764 = vmatprep.subr.mxu0 0.0
    %1765 = vmatpush1.msra.mxu0 0.0
    %1766 = vmatprep.subr.mxu0 0.0
    %1767 = vmatpush1.msra.mxu0 0.0
    %1768 = vmatprep.subr.mxu0 0.0
    %1769 = vmatpush1.msra.mxu0 0.0
    %1770 = vmatprep.subr.mxu0 0.0
    %1771 = vmatpush1.msra.mxu0 0.0
    %1772 = vmatprep.subr.mxu0 0.0
    %1773 = vmatpush1.msra.mxu0 0.0
    %1774 = vmatprep.subr.mxu0 0.0
    %1775 = vmatpush1.msra.mxu0 0.0
    %1776 = vmatprep.mubr.f32.mxu0 0.0
    %1777 = vmatmul.mubr.f32.gmra.mrb[0].mxu0 %v1707
    %v1778 = vpop.f32.mrb[0].mxu0
    %v1779 = vadd.f32 0.0, %v1778
    %v1780 = vpop.f32.mrb[0].mxu0
    %1781 = vmatprep.mubr.f32.mxu0 0.0
    %1782 = vmatmul.mubr.f32.gmra.mrb[0].mxu0 %v1710
    %v1783 = vpop.f32.mrb[0].mxu0
    %v1784 = vadd.f32 0.0, %v1783
    %v1785 = vpop.f32.mrb[0].mxu0
    %1786 = vdwg.mxu0
    %s1787 = sld [smem:[#allocation8 + $0x3]]
    %v1788 = vstv %s1787
    %v1789 = vmul.f32 %v1788, %v507
    %v1790 = vmul.f32 %v1788, %v508
    %v1791 = vmul.f32 %v1788, %v509
    %v1792 = vmul.f32 %v1788, %v510
    %s1793 = sld [smem:[#allocation8 + $0x7]]
    %v1794 = vstv %s1793
    %v1795 = vmul.f32 %v1794, %v725
    %v1796 = vmul.f32 %v1794, %v726
    %v1797 = vmul.f32 %v1794, %v727
    %v1798 = vmul.f32 %v1794, %v728
    %v1799 = vadd.f32 %v1789, %v1795
    %v1800 = vadd.f32 %v1790, %v1796
    %v1801 = vadd.f32 %v1791, %v1797
    %v1802 = vadd.f32 %v1792, %v1798
    %s1803 = sld [smem:[#allocation8 + $0xb]]
    %v1804 = vstv %s1803
    %v1805 = vmul.f32 %v1804, %v943
    %v1806 = vmul.f32 %v1804, %v944
    %v1807 = vmul.f32 %v1804, %v945
    %v1808 = vmul.f32 %v1804, %v946
    %v1809 = vadd.f32 %v1799, %v1805
    %v1810 = vadd.f32 %v1800, %v1806
    %v1811 = vadd.f32 %v1801, %v1807
    %v1812 = vadd.f32 %v1802, %v1808
    %s1813 = sld [smem:[#allocation8 + $0xf]]
    %v1814 = vstv %s1813
    %v1815 = vmul.f32 %v1814, %v1161
    %v1816 = vmul.f32 %v1814, %v1162
    %v1817 = vmul.f32 %v1814, %v1163
    %v1818 = vmul.f32 %v1814, %v1164
    %v1819 = vadd.f32 %v1809, %v1815
    %v1820 = vadd.f32 %v1810, %v1816
    %v1821 = vadd.f32 %v1811, %v1817
    %v1822 = vadd.f32 %v1812, %v1818
    %1823 = vrot.lane.b32.xlu0 %v216, 80
    %v1824 = vpop.permute.xlu0 %1823
    %1825 = vrot.lane.b32.xlu0 %v222, 80
    %v1826 = vpop.permute.xlu0 %1825
    %v1830 = vsel %vm466, %v1819, 0
    %v1833 = vsel %vm466, %v1820, 0
    %1835 = vmatprep.subr.mxu0 0.0
    %1836 = vmatpush1.msra.mxu0 %v1824
    %1837 = vmatprep.subr.mxu0 0.0
    %1838 = vmatpush1.msra.mxu0 %v1826
    %1839 = vmatprep.subr.mxu0 0.0
    %1840 = vmatpush1.msra.mxu0 0.0
    %1841 = vmatprep.subr.mxu0 0.0
    %1842 = vmatpush1.msra.mxu0 0.0
    %1843 = vmatprep.subr.mxu0 0.0
    %1844 = vmatpush1.msra.mxu0 0.0
    %1845 = vmatprep.subr.mxu0 0.0
    %1846 = vmatpush1.msra.mxu0 0.0
    %1847 = vmatprep.subr.mxu0 0.0
    %1848 = vmatpush1.msra.mxu0 0.0
    %1849 = vmatprep.subr.mxu0 0.0
    %1850 = vmatpush1.msra.mxu0 0.0
    %1851 = vmatprep.subr.mxu0 0.0
    %1852 = vmatpush1.msra.mxu0 0.0
    %1853 = vmatprep.subr.mxu0 0.0
    %1854 = vmatpush1.msra.mxu0 0.0
    %1855 = vmatprep.subr.mxu0 0.0
    %1856 = vmatpush1.msra.mxu0 0.0
    %1857 = vmatprep.subr.mxu0 0.0
    %1858 = vmatpush1.msra.mxu0 0.0
    %1859 = vmatprep.subr.mxu0 0.0
    %1860 = vmatpush1.msra.mxu0 0.0
    %1861 = vmatprep.subr.mxu0 0.0
    %1862 = vmatpush1.msra.mxu0 0.0
    %1863 = vmatprep.subr.mxu0 0.0
    %1864 = vmatpush1.msra.mxu0 0.0
    %1865 = vmatprep.subr.mxu0 0.0
    %1866 = vmatpush1.msra.mxu0 0.0
    %1867 = vmatprep.subr.mxu0 0.0
    %1868 = vmatpush1.msra.mxu0 0.0
    %1869 = vmatprep.subr.mxu0 0.0
    %1870 = vmatpush1.msra.mxu0 0.0
    %1871 = vmatprep.subr.mxu0 0.0
    %1872 = vmatpush1.msra.mxu0 0.0
    %1873 = vmatprep.subr.mxu0 0.0
    %1874 = vmatpush1.msra.mxu0 0.0
    %1875 = vmatprep.subr.mxu0 0.0
    %1876 = vmatpush1.msra.mxu0 0.0
    %1877 = vmatprep.subr.mxu0 0.0
    %1878 = vmatpush1.msra.mxu0 0.0
    %1879 = vmatprep.subr.mxu0 0.0
    %1880 = vmatpush1.msra.mxu0 0.0
    %1881 = vmatprep.subr.mxu0 0.0
    %1882 = vmatpush1.msra.mxu0 0.0
    %1883 = vmatprep.subr.mxu0 0.0
    %1884 = vmatpush1.msra.mxu0 0.0
    %1885 = vmatprep.subr.mxu0 0.0
    %1886 = vmatpush1.msra.mxu0 0.0
    %1887 = vmatprep.subr.mxu0 0.0
    %1888 = vmatpush1.msra.mxu0 0.0
    %1889 = vmatprep.subr.mxu0 0.0
    %1890 = vmatpush1.msra.mxu0 0.0
    %1891 = vmatprep.subr.mxu0 0.0
    %1892 = vmatpush1.msra.mxu0 0.0
    %1893 = vmatprep.subr.mxu0 0.0
    %1894 = vmatpush1.msra.mxu0 0.0
    %1895 = vmatprep.subr.mxu0 0.0
    %1896 = vmatpush1.msra.mxu0 0.0
    %1897 = vmatprep.subr.mxu0 0.0
    %1898 = vmatpush1.msra.mxu0 0.0
    %1899 = vmatprep.mubr.f32.mxu0 0.0
    %1900 = vmatmul.mubr.f32.gmra.mrb[0].mxu0 %v1830
    %v1901 = vpop.f32.mrb[0].mxu0
    %v1902 = vadd.f32 0.0, %v1901
    %v1903 = vpop.f32.mrb[0].mxu0
    %1904 = vmatprep.mubr.f32.mxu0 0.0
    %1905 = vmatmul.mubr.f32.gmra.mrb[0].mxu0 %v1833
    %v1906 = vpop.f32.mrb[0].mxu0
    %v1907 = vadd.f32 0.0, %v1906
    %v1908 = vpop.f32.mrb[0].mxu0
    %1909 = vdwg.mxu0
    %1910 = vrot.lane.b32.xlu0 %v228, 80
    %v1911 = vpop.permute.xlu0 %1910
    %1912 = vrot.lane.b32.xlu0 %v234, 80
    %v1913 = vpop.permute.xlu0 %1912
    %v1917 = vsel %vm466, %v1821, 0
    %v1920 = vsel %vm466, %v1822, 0
    %1922 = vmatprep.subr.mxu0 0.0
    %1923 = vmatpush1.msra.mxu0 %v1911
    %1924 = vmatprep.subr.mxu0 0.0
    %1925 = vmatpush1.msra.mxu0 %v1913
    %1926 = vmatprep.subr.mxu0 0.0
    %1927 = vmatpush1.msra.mxu0 0.0
    %1928 = vmatprep.subr.mxu0 0.0
    %1929 = vmatpush1.msra.mxu0 0.0
    %1930 = vmatprep.subr.mxu0 0.0
    %1931 = vmatpush1.msra.mxu0 0.0
    %1932 = vmatprep.subr.mxu0 0.0
    %1933 = vmatpush1.msra.mxu0 0.0
    %1934 = vmatprep.subr.mxu0 0.0
    %1935 = vmatpush1.msra.mxu0 0.0
    %1936 = vmatprep.subr.mxu0 0.0
    %1937 = vmatpush1.msra.mxu0 0.0
    %1938 = vmatprep.subr.mxu0 0.0
    %1939 = vmatpush1.msra.mxu0 0.0
    %1940 = vmatprep.subr.mxu0 0.0
    %1941 = vmatpush1.msra.mxu0 0.0
    %1942 = vmatprep.subr.mxu0 0.0
    %1943 = vmatpush1.msra.mxu0 0.0
    %1944 = vmatprep.subr.mxu0 0.0
    %1945 = vmatpush1.msra.mxu0 0.0
    %1946 = vmatprep.subr.mxu0 0.0
    %1947 = vmatpush1.msra.mxu0 0.0
    %1948 = vmatprep.subr.mxu0 0.0
    %1949 = vmatpush1.msra.mxu0 0.0
    %1950 = vmatprep.subr.mxu0 0.0
    %1951 = vmatpush1.msra.mxu0 0.0
    %1952 = vmatprep.subr.mxu0 0.0
    %1953 = vmatpush1.msra.mxu0 0.0
    %1954 = vmatprep.subr.mxu0 0.0
    %1955 = vmatpush1.msra.mxu0 0.0
    %1956 = vmatprep.subr.mxu0 0.0
    %1957 = vmatpush1.msra.mxu0 0.0
    %1958 = vmatprep.subr.mxu0 0.0
    %1959 = vmatpush1.msra.mxu0 0.0
    %1960 = vmatprep.subr.mxu0 0.0
    %1961 = vmatpush1.msra.mxu0 0.0
    %1962 = vmatprep.subr.mxu0 0.0
    %1963 = vmatpush1.msra.mxu0 0.0
    %1964 = vmatprep.subr.mxu0 0.0
    %1965 = vmatpush1.msra.mxu0 0.0
    %1966 = vmatprep.subr.mxu0 0.0
    %1967 = vmatpush1.msra.mxu0 0.0
    %1968 = vmatprep.subr.mxu0 0.0
    %1969 = vmatpush1.msra.mxu0 0.0
    %1970 = vmatprep.subr.mxu0 0.0
    %1971 = vmatpush1.msra.mxu0 0.0
    %1972 = vmatprep.subr.mxu0 0.0
    %1973 = vmatpush1.msra.mxu0 0.0
    %1974 = vmatprep.subr.mxu0 0.0
    %1975 = vmatpush1.msra.mxu0 0.0
    %1976 = vmatprep.subr.mxu0 0.0
    %1977 = vmatpush1.msra.mxu0 0.0
    %1978 = vmatprep.subr.mxu0 0.0
    %1979 = vmatpush1.msra.mxu0 0.0
    %1980 = vmatprep.subr.mxu0 0.0
    %1981 = vmatpush1.msra.mxu0 0.0
    %1982 = vmatprep.subr.mxu0 0.0
    %1983 = vmatpush1.msra.mxu0 0.0
    %1984 = vmatprep.subr.mxu0 0.0
    %1985 = vmatpush1.msra.mxu0 0.0
    %1986 = vmatprep.mubr.f32.mxu0 0.0
    %1987 = vmatmul.mubr.f32.gmra.mrb[0].mxu0 %v1917
    %v1988 = vpop.f32.mrb[0].mxu0
    %v1989 = vadd.f32 0.0, %v1988
    %v1990 = vpop.f32.mrb[0].mxu0
    %1991 = vmatprep.mubr.f32.mxu0 0.0
    %1992 = vmatmul.mubr.f32.gmra.mrb[0].mxu0 %v1920
    %v1993 = vpop.f32.mrb[0].mxu0
    %v1994 = vadd.f32 0.0, %v1993
    %v1995 = vpop.f32.mrb[0].mxu0
    %1996 = vdwg.mxu0
    %2001 = vrot.lane.b32.xlu0 %v1480, 16
    %v2002 = vpop.permute.xlu0 %2001
    %2003 = vrot.lane.b32.xlu0 %v1485, 16
    %v2004 = vpop.permute.xlu0 %2003
    %2005 = vrot.lane.b32.xlu0 %v1569, 16
    %v2006 = vpop.permute.xlu0 %2005
    %2007 = vrot.lane.b32.xlu0 %v1574, 16
    %v2008 = vpop.permute.xlu0 %2007
    %2017 = vrot.lane.b32.xlu0 %v1692, 32
    %v2018 = vpop.permute.xlu0 %2017
    %2019 = vrot.lane.b32.xlu0 %v1697, 32
    %v2020 = vpop.permute.xlu0 %2019
    %2021 = vrot.lane.b32.xlu0 %v1779, 32
    %v2022 = vpop.permute.xlu0 %2021
    %2023 = vrot.lane.b32.xlu0 %v1784, 32
    %v2024 = vpop.permute.xlu0 %2023
    %2033 = vrot.lane.b32.xlu0 %v1902, 48
    %v2034 = vpop.permute.xlu0 %2033
    %2035 = vrot.lane.b32.xlu0 %v1907, 48
    %v2036 = vpop.permute.xlu0 %2035
    %2037 = vrot.lane.b32.xlu0 %v1989, 48
    %v2038 = vpop.permute.xlu0 %2037
    %2039 = vrot.lane.b32.xlu0 %v1994, 48
    %v2040 = vpop.permute.xlu0 %2039
    %v2045 = vsel %vm466, %v1274, %v2002
    %v2046 = vsel %vm466, %v1279, %v2004
    %v2047 = vsel %vm466, %v1355, %v2006
    %v2048 = vsel %vm466, %v1360, %v2008
    %v2049 = vsel %vm134, %v2045, %v2018
    %v2050 = vsel %vm134, %v2046, %v2020
    %v2051 = vsel %vm134, %v2047, %v2022
    %v2052 = vsel %vm134, %v2048, %v2024
    %vm2053 = vcmask 392192
    %v2054 = vsel %vm2053, %v2049, %v2034
    %v2055 = vsel %vm2053, %v2050, %v2036
    %v2056 = vsel %vm2053, %v2051, %v2038
    %v2057 = vsel %vm2053, %v2052, %v2040
    %v2058 = vld [vmem:[%s6] sm:$0xff]
    %v2059 = vld [vmem:[%s6 + $0x8] sm:$0xff]
    %v2060 = vld [vmem:[%s6 + $0x10] sm:$0xff]
    %v2061 = vld [vmem:[%s6 + $0x18] sm:$0xff]
    %v2062 = vld [vmem:[%s6 + $0x20] sm:$0xff]
    %v2063 = vld [vmem:[%s6 + $0x28] sm:$0xff]
    %v2064 = vld [vmem:[%s6 + $0x30] sm:$0xff]
    %v2065 = vld [vmem:[%s6 + $0x38] sm:$0xff]
    %v2067 = vsel %vm285, %v2054, 0
    %v2070 = vsel %vm285, %v2055, 0
    %v2073 = vsel %vm285, %v2056, 0
    %v2076 = vsel %vm285, %v2057, 0
    %2078 = vmatprep.subr.mxu0 0.0
    %2079 = vmatpush1.msra.mxu0 %v2058
    %2080 = vmatprep.subr.mxu0 0.0
    %2081 = vmatpush1.msra.mxu0 %v2059
    %2082 = vmatprep.subr.mxu0 0.0
    %2083 = vmatpush1.msra.mxu0 %v2060
    %2084 = vmatprep.subr.mxu0 0.0
    %2085 = vmatpush1.msra.mxu0 %v2061
    %2086 = vmatprep.subr.mxu0 0.0
    %2087 = vmatpush1.msra.mxu0 %v2062
    %2088 = vmatprep.subr.mxu0 0.0
    %2089 = vmatpush1.msra.mxu0 %v2063
    %2090 = vmatprep.subr.mxu0 0.0
    %2091 = vmatpush1.msra.mxu0 %v2064
    %2092 = vmatprep.subr.mxu0 0.0
    %2093 = vmatpush1.msra.mxu0 %v2065
    %2094 = vmatprep.subr.mxu0 0.0
    %2095 = vmatpush1.msra.mxu0 0.0
    %2096 = vmatprep.subr.mxu0 0.0
    %2097 = vmatpush1.msra.mxu0 0.0
    %2098 = vmatprep.subr.mxu0 0.0
    %2099 = vmatpush1.msra.mxu0 0.0
    %2100 = vmatprep.subr.mxu0 0.0
    %2101 = vmatpush1.msra.mxu0 0.0
    %2102 = vmatprep.subr.mxu0 0.0
    %2103 = vmatpush1.msra.mxu0 0.0
    %2104 = vmatprep.subr.mxu0 0.0
    %2105 = vmatpush1.msra.mxu0 0.0
    %2106 = vmatprep.subr.mxu0 0.0
    %2107 = vmatpush1.msra.mxu0 0.0
    %2108 = vmatprep.subr.mxu0 0.0
    %2109 = vmatpush1.msra.mxu0 0.0
    %2110 = vmatprep.subr.mxu0 0.0
    %2111 = vmatpush1.msra.mxu0 0.0
    %2112 = vmatprep.subr.mxu0 0.0
    %2113 = vmatpush1.msra.mxu0 0.0
    %2114 = vmatprep.subr.mxu0 0.0
    %2115 = vmatpush1.msra.mxu0 0.0
    %2116 = vmatprep.subr.mxu0 0.0
    %2117 = vmatpush1.msra.mxu0 0.0
    %2118 = vmatprep.subr.mxu0 0.0
    %2119 = vmatpush1.msra.mxu0 0.0
    %2120 = vmatprep.subr.mxu0 0.0
    %2121 = vmatpush1.msra.mxu0 0.0
    %2122 = vmatprep.subr.mxu0 0.0
    %2123 = vmatpush1.msra.mxu0 0.0
    %2124 = vmatprep.subr.mxu0 0.0
    %2125 = vmatpush1.msra.mxu0 0.0
    %2126 = vmatprep.subr.mxu0 0.0
    %2127 = vmatpush1.msra.mxu0 0.0
    %2128 = vmatprep.subr.mxu0 0.0
    %2129 = vmatpush1.msra.mxu0 0.0
    %2130 = vmatprep.subr.mxu0 0.0
    %2131 = vmatpush1.msra.mxu0 0.0
    %2132 = vmatprep.subr.mxu0 0.0
    %2133 = vmatpush1.msra.mxu0 0.0
    %2134 = vmatprep.subr.mxu0 0.0
    %2135 = vmatpush1.msra.mxu0 0.0
    %2136 = vmatprep.subr.mxu0 0.0
    %2137 = vmatpush1.msra.mxu0 0.0
    %2138 = vmatprep.subr.mxu0 0.0
    %2139 = vmatpush1.msra.mxu0 0.0
    %2140 = vmatprep.subr.mxu0 0.0
    %2141 = vmatpush1.msra.mxu0 0.0
    %2142 = vmatprep.mubr.f32.mxu0 0.0
    %2143 = vmatmul.mubr.f32.gmra.mrb[0].mxu0 %v2067
    %v2144 = vpop.f32.mrb[0].mxu0
    %v2145 = vadd.f32 0.0, %v2144
    %v2146 = vpop.f32.mrb[0].mxu0
    %2147 = vmatprep.mubr.f32.mxu0 0.0
    %2148 = vmatmul.mubr.f32.gmra.mrb[0].mxu0 %v2070
    %v2149 = vpop.f32.mrb[0].mxu0
    %v2150 = vadd.f32 0.0, %v2149
    %v2151 = vpop.f32.mrb[0].mxu0
    %2152 = vmatprep.mubr.f32.mxu0 0.0
    %2153 = vmatmul.mubr.f32.gmra.mrb[0].mxu0 %v2073
    %v2154 = vpop.f32.mrb[0].mxu0
    %v2155 = vadd.f32 0.0, %v2154
    %v2156 = vpop.f32.mrb[0].mxu0
    %2157 = vmatprep.mubr.f32.mxu0 0.0
    %2158 = vmatmul.mubr.f32.gmra.mrb[0].mxu0 %v2076
    %v2159 = vpop.f32.mrb[0].mxu0
    %v2160 = vadd.f32 0.0, %v2159
    %v2161 = vpop.f32.mrb[0].mxu0
    %2162 = vdwg.mxu0
    %v2163 = vadd.f32 %v122, %v2145
    %v2164 = vadd.f32 %v123, %v2150
    %v2165 = vadd.f32 %v124, %v2155
    %v2166 = vadd.f32 %v125, %v2160
    %v2167 = vsel %vm134, %v2163, 0.0
    %v2168 = vsel %vm134, %v2164, 0.0
    %v2169 = vadd.f32 %v2167, %v2168
    %v2170 = vsel %vm134, %v2165, 0.0
    %v2171 = vadd.f32 %v2169, %v2170
    %v2172 = vsel %vm134, %v2166, 0.0
    %v2173 = vadd.f32 %v2171, %v2172
    %v2174 = vrot.slane %v2173, 4
    %v2175 = vadd.f32 %v2173, %v2174
    %v2176 = vrot.slane %v2175, 2
    %v2177 = vadd.f32 %v2175, %v2176
    %v2178 = vrot.slane %v2177, 1
    %v2179 = vadd.f32 %v2177, %v2178
    %v2180 = vrcp.pop 32.0
    %v2181 = vmul.f32 %v2179, %v2180
    %v2182 = vsub.f32 %v2163, %v2181
    %v2183 = vsub.f32 %v2164, %v2181
    %v2184 = vsub.f32 %v2165, %v2181
    %v2185 = vsub.f32 %v2166, %v2181
    %v2186 = vmul.f32 %v2182, %v2182
    %v2187 = vmul.f32 %v2183, %v2183
    %v2188 = vmul.f32 %v2184, %v2184
    %v2189 = vmul.f32 %v2185, %v2185
    %v2190 = vsel %vm134, %v2186, 0.0
    %v2191 = vsel %vm134, %v2187, 0.0
    %v2192 = vadd.f32 %v2190, %v2191
    %v2193 = vsel %vm134, %v2188, 0.0
    %v2194 = vadd.f32 %v2192, %v2193
    %v2195 = vsel %vm134, %v2189, 0.0
    %v2196 = vadd.f32 %v2194, %v2195
    %v2197 = vrot.slane %v2196, 4
    %v2198 = vadd.f32 %v2196, %v2197
    %v2199 = vrot.slane %v2198, 2
    %v2200 = vadd.f32 %v2198, %v2199
    %v2201 = vrot.slane %v2200, 1
    %v2202 = vadd.f32 %v2200, %v2201
    %v2203 = vmul.f32 %v2202, %v2180
    %v2204 = vadd.f32 %v2203, 1e-05
    %v2205 = vrsqrt.pop %v2204
    %v2206 = vmul.f32 %v2182, %v2205
    %v2207 = vmul.f32 %v2183, %v2205
    %v2208 = vmul.f32 %v2184, %v2205
    %v2209 = vmul.f32 %v2185, %v2205
    %v2210 = vld [vmem:[%s11] sm:$0x1]
    %v2212 = vlaneseq
    %v2213 = vshrl.u32 %v2212, 7
    %v2214 = vsub.s32 0, %v2213
    %v2215 = vrot.slane %v2210, %v2214
    %v2217 = vmul.f32 %v2206, %v2215
    %v2218 = vmul.f32 %v2207, %v2215
    %v2219 = vmul.f32 %v2208, %v2215
    %v2220 = vmul.f32 %v2209, %v2215
    %v2221 = vld [vmem:[%s12] sm:$0x1]
    %v2223 = vlaneseq
    %v2224 = vshrl.u32 %v2223, 7
    %v2225 = vsub.s32 0, %v2224
    %v2226 = vrot.slane %v2221, %v2225
    %v2228 = vadd.f32 %v2217, %v2226
    %v2229 = vadd.f32 %v2218, %v2226
    %v2230 = vadd.f32 %v2219, %v2226
    %v2231 = vadd.f32 %v2220, %v2226
    %v2232 = vld [vmem:[#allocation2] sm:$0x3]
    %v2233 = vld [vmem:[#allocation9] sm:$0xff]
    %v2234 = vld [vmem:[#allocation10] sm:$0x1]
    %v2236 = vlaneseq
    %v2237 = vshrl.u32 %v2236, 7
    %v2238 = vsub.s32 0, %v2237
    %v2239 = vrot.slane %v2234, %v2238
    %vm2241 = vcmask 64512
    %v2243 = vsel %vm2241, %v2232, 0
    %2245 = vmatprep.subr.mxu0 0.0
    %2246 = vmatpush1.msra.mxu0 %v2233
    %2247 = vmatprep.subr.mxu0 0.0
    %2248 = vmatpush1.msra.mxu0 0.0
    %2249 = vmatprep.subr.mxu0 0.0
    %2250 = vmatpush1.msra.mxu0 0.0
    %2251 = vmatprep.subr.mxu0 0.0
    %2252 = vmatpush1.msra.mxu0 0.0
    %2253 = vmatprep.subr.mxu0 0.0
    %2254 = vmatpush1.msra.mxu0 0.0
    %2255 = vmatprep.subr.mxu0 0.0
    %2256 = vmatpush1.msra.mxu0 0.0
    %2257 = vmatprep.subr.mxu0 0.0
    %2258 = vmatpush1.msra.mxu0 0.0
    %2259 = vmatprep.subr.mxu0 0.0
    %2260 = vmatpush1.msra.mxu0 0.0
    %2261 = vmatprep.subr.mxu0 0.0
    %2262 = vmatpush1.msra.mxu0 0.0
    %2263 = vmatprep.subr.mxu0 0.0
    %2264 = vmatpush1.msra.mxu0 0.0
    %2265 = vmatprep.subr.mxu0 0.0
    %2266 = vmatpush1.msra.mxu0 0.0
    %2267 = vmatprep.subr.mxu0 0.0
    %2268 = vmatpush1.msra.mxu0 0.0
    %2269 = vmatprep.subr.mxu0 0.0
    %2270 = vmatpush1.msra.mxu0 0.0
    %2271 = vmatprep.subr.mxu0 0.0
    %2272 = vmatpush1.msra.mxu0 0.0
    %2273 = vmatprep.subr.mxu0 0.0
    %2274 = vmatpush1.msra.mxu0 0.0
    %2275 = vmatprep.subr.mxu0 0.0
    %2276 = vmatpush1.msra.mxu0 0.0
    %2277 = vmatprep.subr.mxu0 0.0
    %2278 = vmatpush1.msra.mxu0 0.0
    %2279 = vmatprep.subr.mxu0 0.0
    %2280 = vmatpush1.msra.mxu0 0.0
    %2281 = vmatprep.subr.mxu0 0.0
    %2282 = vmatpush1.msra.mxu0 0.0
    %2283 = vmatprep.subr.mxu0 0.0
    %2284 = vmatpush1.msra.mxu0 0.0
    %2285 = vmatprep.subr.mxu0 0.0
    %2286 = vmatpush1.msra.mxu0 0.0
    %2287 = vmatprep.subr.mxu0 0.0
    %2288 = vmatpush1.msra.mxu0 0.0
    %2289 = vmatprep.subr.mxu0 0.0
    %2290 = vmatpush1.msra.mxu0 0.0
    %2291 = vmatprep.subr.mxu0 0.0
    %2292 = vmatpush1.msra.mxu0 0.0
    %2293 = vmatprep.subr.mxu0 0.0
    %2294 = vmatpush1.msra.mxu0 0.0
    %2295 = vmatprep.subr.mxu0 0.0
    %2296 = vmatpush1.msra.mxu0 0.0
    %2297 = vmatprep.subr.mxu0 0.0
    %2298 = vmatpush1.msra.mxu0 0.0
    %2299 = vmatprep.subr.mxu0 0.0
    %2300 = vmatpush1.msra.mxu0 0.0
    %2301 = vmatprep.subr.mxu0 0.0
    %2302 = vmatpush1.msra.mxu0 0.0
    %2303 = vmatprep.subr.mxu0 0.0
    %2304 = vmatpush1.msra.mxu0 0.0
    %2305 = vmatprep.subr.mxu0 0.0
    %2306 = vmatpush1.msra.mxu0 0.0
    %2307 = vmatprep.subr.mxu0 0.0
    %2308 = vmatpush1.msra.mxu0 0.0
    %2309 = vmatprep.mubr.f32.mxu0 0.0
    %2310 = vmatmul.mubr.f32.gmra.mrb[0].mxu0 %v2243
    %v2311 = vpop.f32.mrb[0].mxu0
    %v2312 = vadd.f32 %v2239, %v2311
    %v2313 = vpop.f32.mrb[0].mxu0
    %2314 = vdwg.mxu0
    %v2317 = vunpack.c.l.s4 1966171168
    %v2318 = vunpack.c.0.s8 %v2317
    %v2319 = vlaneseq
    %v2320 = vshrl.u32 %v2319, 7
    %v2321 = vsub.s32 %v2318, %v2320
    %v2322 = vrot.slane %v2312, %v2321
    %v2323 = vcombine.high %v2322, %v2322
    %v2325 = vunpack.c.l.s4 1966171168
    %v2326 = vunpack.c.0.s8 %v2325
    %v2327 = vlaneseq
    %v2328 = vshrl.u32 %v2327, 7
    %v2329 = vsub.s32 %v2326, %v2328
    %v2330 = vrot.slane %v2322, %v2329
    %v2332 = vunpack.c.l.s4 1966171168
    %v2333 = vunpack.c.0.s8 %v2332
    %v2334 = vlaneseq
    %v2335 = vshrl.u32 %v2334, 7
    %v2336 = vsub.s32 %v2333, %v2335
    %v2337 = vrot.slane %v2323, %v2336
    %v2338 = vlaneseq
    %v2339 = vshrl.u32 %v2338, 7
    %v2340 = vsub.s32 0, %v2339
    %v2341 = vrot.slane %v2330, %v2340
    %v2342 = vlaneseq
    %v2343 = vshrl.u32 %v2342, 7
    %v2344 = vsub.s32 0, %v2343
    %v2345 = vrot.slane %v2337, %v2344
    %v2348 = vld [vmem:[%s9] sm:$0xff]
    %v2349 = vld [vmem:[%s9 + $0x8] sm:$0xff]
    %v2350 = vld [vmem:[%s9 + $0x10] sm:$0xff]
    %v2351 = vld [vmem:[%s9 + $0x18] sm:$0xff]
    %v2353 = vsel %vm134, %v2228, 0
    %v2356 = vsel %vm134, %v2229, 0
    %v2359 = vsel %vm134, %v2230, 0
    %v2362 = vsel %vm134, %v2231, 0
    %2364 = vmatprep.subr.mxu0 0.0
    %2365 = vmatpush1.msra.mxu0 %v2348
    %2366 = vmatprep.subr.mxu0 0.0
    %2367 = vmatpush1.msra.mxu0 %v2349
    %2368 = vmatprep.subr.mxu0 0.0
    %2369 = vmatpush1.msra.mxu0 %v2350
    %2370 = vmatprep.subr.mxu0 0.0
    %2371 = vmatpush1.msra.mxu0 %v2351
    %2372 = vmatprep.subr.mxu0 0.0
    %2373 = vmatpush1.msra.mxu0 0.0
    %2374 = vmatprep.subr.mxu0 0.0
    %2375 = vmatpush1.msra.mxu0 0.0
    %2376 = vmatprep.subr.mxu0 0.0
    %2377 = vmatpush1.msra.mxu0 0.0
    %2378 = vmatprep.subr.mxu0 0.0
    %2379 = vmatpush1.msra.mxu0 0.0
    %2380 = vmatprep.subr.mxu0 0.0
    %2381 = vmatpush1.msra.mxu0 0.0
    %2382 = vmatprep.subr.mxu0 0.0
    %2383 = vmatpush1.msra.mxu0 0.0
    %2384 = vmatprep.subr.mxu0 0.0
    %2385 = vmatpush1.msra.mxu0 0.0
    %2386 = vmatprep.subr.mxu0 0.0
    %2387 = vmatpush1.msra.mxu0 0.0
    %2388 = vmatprep.subr.mxu0 0.0
    %2389 = vmatpush1.msra.mxu0 0.0
    %2390 = vmatprep.subr.mxu0 0.0
    %2391 = vmatpush1.msra.mxu0 0.0
    %2392 = vmatprep.subr.mxu0 0.0
    %2393 = vmatpush1.msra.mxu0 0.0
    %2394 = vmatprep.subr.mxu0 0.0
    %2395 = vmatpush1.msra.mxu0 0.0
    %2396 = vmatprep.subr.mxu0 0.0
    %2397 = vmatpush1.msra.mxu0 0.0
    %2398 = vmatprep.subr.mxu0 0.0
    %2399 = vmatpush1.msra.mxu0 0.0
    %2400 = vmatprep.subr.mxu0 0.0
    %2401 = vmatpush1.msra.mxu0 0.0
    %2402 = vmatprep.subr.mxu0 0.0
    %2403 = vmatpush1.msra.mxu0 0.0
    %2404 = vmatprep.subr.mxu0 0.0
    %2405 = vmatpush1.msra.mxu0 0.0
    %2406 = vmatprep.subr.mxu0 0.0
    %2407 = vmatpush1.msra.mxu0 0.0
    %2408 = vmatprep.subr.mxu0 0.0
    %2409 = vmatpush1.msra.mxu0 0.0
    %2410 = vmatprep.subr.mxu0 0.0
    %2411 = vmatpush1.msra.mxu0 0.0
    %2412 = vmatprep.subr.mxu0 0.0
    %2413 = vmatpush1.msra.mxu0 0.0
    %2414 = vmatprep.subr.mxu0 0.0
    %2415 = vmatpush1.msra.mxu0 0.0
    %2416 = vmatprep.subr.mxu0 0.0
    %2417 = vmatpush1.msra.mxu0 0.0
    %2418 = vmatprep.subr.mxu0 0.0
    %2419 = vmatpush1.msra.mxu0 0.0
    %2420 = vmatprep.subr.mxu0 0.0
    %2421 = vmatpush1.msra.mxu0 0.0
    %2422 = vmatprep.subr.mxu0 0.0
    %2423 = vmatpush1.msra.mxu0 0.0
    %2424 = vmatprep.subr.mxu0 0.0
    %2425 = vmatpush1.msra.mxu0 0.0
    %2426 = vmatprep.subr.mxu0 0.0
    %2427 = vmatpush1.msra.mxu0 0.0
    %2428 = vmatprep.mubr.f32.mxu0 0.0
    %2429 = vmatmul.mubr.f32.gmra.mrb[0].mxu0 %v2353
    %v2430 = vpop.f32.mrb[0].mxu0
    %v2431 = vadd.f32 %v2341, %v2430
    %v2432 = vpop.f32.mrb[0].mxu0
    %2433 = vmatprep.mubr.f32.mxu0 0.0
    %2434 = vmatmul.mubr.f32.gmra.mrb[0].mxu0 %v2356
    %v2435 = vpop.f32.mrb[0].mxu0
    %v2436 = vadd.f32 %v2341, %v2435
    %v2437 = vpop.f32.mrb[0].mxu0
    %2438 = vmatprep.mubr.f32.mxu0 0.0
    %2439 = vmatmul.mubr.f32.gmra.mrb[0].mxu0 %v2359
    %v2440 = vpop.f32.mrb[0].mxu0
    %v2441 = vadd.f32 %v2345, %v2440
    %v2442 = vpop.f32.mrb[0].mxu0
    %2443 = vmatprep.mubr.f32.mxu0 0.0
    %2444 = vmatmul.mubr.f32.gmra.mrb[0].mxu0 %v2362
    %v2445 = vpop.f32.mrb[0].mxu0
    %v2446 = vadd.f32 %v2345, %v2445
    %v2447 = vpop.f32.mrb[0].mxu0
    %2448 = vdwg.mxu0
    %v2449 = vmax.f32 %v2431, 0.0
    %v2450 = vmax.f32 %v2436, 0.0
    %v2451 = vmax.f32 %v2441, 0.0
    %v2452 = vmax.f32 %v2446, 0.0
    %v2453 = vld [vmem:[#allocation12] sm:$0xff]
    %v2454 = vld [vmem:[#allocation12 + $0x8] sm:$0xff]
    %v2455 = vld [vmem:[#allocation12 + $0x10] sm:$0xff]
    %v2456 = vld [vmem:[#allocation12 + $0x18] sm:$0xff]
    %v2458 = vsel %vm134, %v2449, 0
    %v2461 = vsel %vm134, %v2450, 0
    %v2464 = vsel %vm134, %v2451, 0
    %v2467 = vsel %vm134, %v2452, 0
    %2469 = vmatprep.subr.mxu0 0.0
    %2470 = vmatpush1.msra.mxu0 %v2453
    %2471 = vmatprep.subr.mxu0 0.0
    %2472 = vmatpush1.msra.mxu0 %v2454
    %2473 = vmatprep.subr.mxu0 0.0
    %2474 = vmatpush1.msra.mxu0 %v2455
    %2475 = vmatprep.subr.mxu0 0.0
    %2476 = vmatpush1.msra.mxu0 %v2456
    %2477 = vmatprep.subr.mxu0 0.0
    %2478 = vmatpush1.msra.mxu0 0.0
    %2479 = vmatprep.subr.mxu0 0.0
    %2480 = vmatpush1.msra.mxu0 0.0
    %2481 = vmatprep.subr.mxu0 0.0
    %2482 = vmatpush1.msra.mxu0 0.0
    %2483 = vmatprep.subr.mxu0 0.0
    %2484 = vmatpush1.msra.mxu0 0.0
    %2485 = vmatprep.subr.mxu0 0.0
    %2486 = vmatpush1.msra.mxu0 0.0
    %2487 = vmatprep.subr.mxu0 0.0
    %2488 = vmatpush1.msra.mxu0 0.0
    %2489 = vmatprep.subr.mxu0 0.0
    %2490 = vmatpush1.msra.mxu0 0.0
    %2491 = vmatprep.subr.mxu0 0.0
    %2492 = vmatpush1.msra.mxu0 0.0
    %2493 = vmatprep.subr.mxu0 0.0
    %2494 = vmatpush1.msra.mxu0 0.0
    %2495 = vmatprep.subr.mxu0 0.0
    %2496 = vmatpush1.msra.mxu0 0.0
    %2497 = vmatprep.subr.mxu0 0.0
    %2498 = vmatpush1.msra.mxu0 0.0
    %2499 = vmatprep.subr.mxu0 0.0
    %2500 = vmatpush1.msra.mxu0 0.0
    %2501 = vmatprep.subr.mxu0 0.0
    %2502 = vmatpush1.msra.mxu0 0.0
    %2503 = vmatprep.subr.mxu0 0.0
    %2504 = vmatpush1.msra.mxu0 0.0
    %2505 = vmatprep.subr.mxu0 0.0
    %2506 = vmatpush1.msra.mxu0 0.0
    %2507 = vmatprep.subr.mxu0 0.0
    %2508 = vmatpush1.msra.mxu0 0.0
    %2509 = vmatprep.subr.mxu0 0.0
    %2510 = vmatpush1.msra.mxu0 0.0
    %2511 = vmatprep.subr.mxu0 0.0
    %2512 = vmatpush1.msra.mxu0 0.0
    %2513 = vmatprep.subr.mxu0 0.0
    %2514 = vmatpush1.msra.mxu0 0.0
    %2515 = vmatprep.subr.mxu0 0.0
    %2516 = vmatpush1.msra.mxu0 0.0
    %2517 = vmatprep.subr.mxu0 0.0
    %2518 = vmatpush1.msra.mxu0 0.0
    %2519 = vmatprep.subr.mxu0 0.0
    %2520 = vmatpush1.msra.mxu0 0.0
    %2521 = vmatprep.subr.mxu0 0.0
    %2522 = vmatpush1.msra.mxu0 0.0
    %2523 = vmatprep.subr.mxu0 0.0
    %2524 = vmatpush1.msra.mxu0 0.0
    %2525 = vmatprep.subr.mxu0 0.0
    %2526 = vmatpush1.msra.mxu0 0.0
    %2527 = vmatprep.subr.mxu0 0.0
    %2528 = vmatpush1.msra.mxu0 0.0
    %2529 = vmatprep.subr.mxu0 0.0
    %2530 = vmatpush1.msra.mxu0 0.0
    %2531 = vmatprep.subr.mxu0 0.0
    %2532 = vmatpush1.msra.mxu0 0.0
    %2533 = vmatprep.mubr.f32.mxu0 0.0
    %2534 = vmatmul.mubr.f32.gmra.mrb[0].mxu0 %v2458
    %v2535 = vpop.f32.mrb[0].mxu0
    %v2536 = vadd.f32 0.0, %v2535
    %v2537 = vpop.f32.mrb[0].mxu0
    %2538 = vmatprep.mubr.f32.mxu0 0.0
    %2539 = vmatmul.mubr.f32.gmra.mrb[0].mxu0 %v2461
    %v2540 = vpop.f32.mrb[0].mxu0
    %v2541 = vadd.f32 0.0, %v2540
    %v2542 = vpop.f32.mrb[0].mxu0
    %2543 = vmatprep.mubr.f32.mxu0 0.0
    %2544 = vmatmul.mubr.f32.gmra.mrb[0].mxu0 %v2464
    %v2545 = vpop.f32.mrb[0].mxu0
    %v2546 = vadd.f32 0.0, %v2545
    %v2547 = vpop.f32.mrb[0].mxu0
    %2548 = vmatprep.mubr.f32.mxu0 0.0
    %2549 = vmatmul.mubr.f32.gmra.mrb[0].mxu0 %v2467
    %v2550 = vpop.f32.mrb[0].mxu0
    %v2551 = vadd.f32 0.0, %v2550
    %v2552 = vpop.f32.mrb[0].mxu0
    %2553 = vdwg.mxu0
    %v2554 = vadd.f32 %v2228, %v2536
    %v2555 = vadd.f32 %v2229, %v2541
    %v2556 = vadd.f32 %v2230, %v2546
    %v2557 = vadd.f32 %v2231, %v2551
    %v2558 = vsel %vm134, %v2554, 0.0
    %v2559 = vsel %vm134, %v2555, 0.0
    %v2560 = vadd.f32 %v2558, %v2559
    %v2561 = vsel %vm134, %v2556, 0.0
    %v2562 = vadd.f32 %v2560, %v2561
    %v2563 = vsel %vm134, %v2557, 0.0
    %v2564 = vadd.f32 %v2562, %v2563
    %v2565 = vrot.slane %v2564, 4
    %v2566 = vadd.f32 %v2564, %v2565
    %v2567 = vrot.slane %v2566, 2
    %v2568 = vadd.f32 %v2566, %v2567
    %v2569 = vrot.slane %v2568, 1
    %v2570 = vadd.f32 %v2568, %v2569
    %v2571 = vmul.f32 %v2570, %v2180
    %v2572 = vsub.f32 %v2554, %v2571
    %v2573 = vsub.f32 %v2555, %v2571
    %v2574 = vsub.f32 %v2556, %v2571
    %v2575 = vsub.f32 %v2557, %v2571
    %v2576 = vmul.f32 %v2572, %v2572
    %v2577 = vmul.f32 %v2573, %v2573
    %v2578 = vmul.f32 %v2574, %v2574
    %v2579 = vmul.f32 %v2575, %v2575
    %v2580 = vsel %vm134, %v2576, 0.0
    %v2581 = vsel %vm134, %v2577, 0.0
    %v2582 = vadd.f32 %v2580, %v2581
    %v2583 = vsel %vm134, %v2578, 0.0
    %v2584 = vadd.f32 %v2582, %v2583
    %v2585 = vsel %vm134, %v2579, 0.0
    %v2586 = vadd.f32 %v2584, %v2585
    %v2587 = vrot.slane %v2586, 4
    %v2588 = vadd.f32 %v2586, %v2587
    %v2589 = vrot.slane %v2588, 2
    %v2590 = vadd.f32 %v2588, %v2589
    %v2591 = vrot.slane %v2590, 1
    %v2592 = vadd.f32 %v2590, %v2591
    %v2593 = vmul.f32 %v2592, %v2180
    %v2594 = vadd.f32 %v2593, 1e-05
    %v2595 = vrsqrt.pop %v2594
    %v2596 = vmul.f32 %v2572, %v2595
    %v2597 = vmul.f32 %v2573, %v2595
    %v2598 = vmul.f32 %v2574, %v2595
    %v2599 = vmul.f32 %v2575, %v2595
    %v2600 = vld [vmem:[%s13] sm:$0x1]
    %v2602 = vlaneseq
    %v2603 = vshrl.u32 %v2602, 7
    %v2604 = vsub.s32 0, %v2603
    %v2605 = vrot.slane %v2600, %v2604
    %v2607 = vmul.f32 %v2596, %v2605
    %v2608 = vmul.f32 %v2597, %v2605
    %v2609 = vmul.f32 %v2598, %v2605
    %v2610 = vmul.f32 %v2599, %v2605
    %v2611 = vld [vmem:[%s14] sm:$0x1]
    %v2613 = vlaneseq
    %v2614 = vshrl.u32 %v2613, 7
    %v2615 = vsub.s32 0, %v2614
    %v2616 = vrot.slane %v2611, %v2615
    %v2618 = vadd.f32 %v2607, %v2616
    %v2619 = vadd.f32 %v2608, %v2616
    %v2620 = vadd.f32 %v2609, %v2616
    %v2621 = vadd.f32 %v2610, %v2616
    %2622 = vst.msk [vmem:[#allocation13] sm:$0xff] %vm134, %v2618
    %2623 = vst.msk [vmem:[#allocation13 + $0x8] sm:$0xff] %vm134, %v2619
    %2624 = vst.msk [vmem:[#allocation13 + $0x10] sm:$0xff] %vm134, %v2620
    %2625 = vst.msk [vmem:[#allocation13 + $0x18] sm:$0xff] %vm134, %v2621
    // Predicated region
    $region86: #{tpu_custom_call.1} parent=1 // pred_check
      _
    $region87: #{tpu_custom_call.1} parent=1 // pred_check_branch
      %2627 = sbr.rel (0) target = $region89
    $region88: #{tpu_custom_call.1} parent=1 // pred_region
      %s2629 = ssub.s32 512, 512
      %2630 = vsyncadd [#allocation4], %s2629
      %s2631 = sshll.u32 [#allocation13], 4
      %s2632 = int_to_ptr.vmem [resolvable:$true] %s2631
      %2637 = dma.vmem_to_hbm [thread:$0]  %s2632, 512, %s15, [#allocation4], 128, 128, 8
    $region89: #{tpu_custom_call.1} parent=1 // pred_fallthru
      _
    // Predicated region
    $region90: #{tpu_custom_call.1} parent=1 // pred_check
      _
    $region91: #{tpu_custom_call.1} parent=1 // pred_check_branch
      %2639 = sbr.rel (0) target = $region93
    $region92: #{tpu_custom_call.1} parent=1 // pred_region
      %2640 = dma.done [#allocation4], 512
    $region93: #{tpu_custom_call.1} parent=1 // pred_fallthru
      _
    %2641 = vsyncpa [#allocation3], 1
    %2642 = vsyncpa [#allocation7], 1
    %2643 = vsyncpa [#allocation11], 1
    %2644 = vsyncpa [#allocation4], 1
    %2645 = vsyncpa [#allocation5], 1

</llo_original>
